<compile_context>
chip_gen: v7x
topology: tpu7x:2x2x1
jax: 0.10.0
libtpu: 0.0.40
codegen_flags: <defaults>
</compile_context>

<pallas_src>
import functools

import jax
import jax.numpy as jnp
from jax.experimental import pallas as pl
from jax.experimental.pallas import tpu as pltpu

NZ = 16    # latent dim (noise)
NDF = 64   # netF hidden width
NGF = 16   # generator base width
NC = 3     # output image channels
K4 = 4     # ConvTranspose kernel size
BN_EPS = 1e-5
LRELU_SLOPE = 0.2

_TM = 512          # M tile when M is large (multiple of 8 sublanes)
_TN = 256          # N tile when N is large (multiple of 128 lanes)
_MAX_FULL_M = 1024  # at/below this extent -> one full-extent block (no pad)
_MAX_FULL_N = 512


def _plan(dim, tile, max_full):
    """(block, padded_extent): full-extent single block when small."""
    if dim <= max_full:
        return dim, dim
    padded = -(-dim // tile) * tile
    return tile, padded


# --------------------------- Pallas kernel bodies --------------------------

def _head_kernel(noise_ref, fw1_ref, fb1_ref, fw2_ref, fb2_ref,
                 fwmu_ref, fbmu_ref, w1_ref, b1_ref,
                 ppool_ref, pexp_ref, gam_ref, bet_ref, o_ref,
                 *, count, eps, neg_slope):
    """Fused netF MLP + netG layer-1 (1x1 ConvT == dense) + BN1 + ReLU.

    Single block: the whole batch lives in VMEM, BN stats are computed
    in-register (per-channel reduce via a constant pooling matmul), and the
    normalized+activated h1 is written to HBM exactly once (bf16).
    """
    def lrelu(v):
        return jnp.where(v > 0, v, neg_slope * v)

    x = noise_ref[...]
    h = lrelu(jnp.dot(x, fw1_ref[...], preferred_element_type=jnp.float32)
              + fb1_ref[...])
    h = lrelu(jnp.dot(h, fw2_ref[...], preferred_element_type=jnp.float32)
              + fb2_ref[...])
    mu = (jnp.dot(h, fwmu_ref[...], preferred_element_type=jnp.float32)
          + fbmu_ref[...])                                  # netF(noise)[0]

    # netG layer 1: ConvT(NZ -> 2*NGF, k4, s1, p0) on a 1x1 map == dense.
    # Columns ordered (kh, kw, c) so the output reshapes straight to NHWC.
    y = (jnp.dot(mu, w1_ref[...], preferred_element_type=jnp.float32)
         + b1_ref[...])                                     # (B, 16*C1)

    # Train-mode BatchNorm2d stats per channel over (batch, spatial), reduced
    # with constant 0/1 pooling matmuls (stays on the MXU, no reshapes).
    # NOTE: E[y^2]-E[y]^2 in f32 with a >=0 clamp (same as reference impl).
    s_col = jnp.sum(y, axis=0, keepdims=True)               # (1, 16*C1)
    q_col = jnp.sum(y * y, axis=0, keepdims=True)
    s_c = jnp.dot(s_col, ppool_ref[...], preferred_element_type=jnp.float32)
    q_c = jnp.dot(q_col, ppool_ref[...], preferred_element_type=jnp.float32)
    mean = s_c * (1.0 / count)
    var = jnp.maximum(q_c * (1.0 / count) - mean * mean, 0.0)
    scale_c = gam_ref[...] * jax.lax.rsqrt(var + eps)        # (1, C1)
    shift_c = bet_ref[...] - mean * scale_c
    scale = jnp.dot(scale_c, pexp_ref[...], preferred_element_type=jnp.float32)
    shift = jnp.dot(shift_c, pexp_ref[...], preferred_element_type=jnp.float32)

    o_ref[...] = jnp.maximum(y * scale + shift, 0.0).astype(o_ref.dtype)


def _mm_kernel(x_ref, w_ref, o_ref):
    # Full-K single-dot MXU matmul; output written exactly once, lane-dense.
    o_ref[...] = jnp.dot(x_ref[...], w_ref[...],
                         preferred_element_type=jnp.float32).astype(o_ref.dtype)


def _bn_relu_mm_kernel(x_ref, sc_ref, sh_ref, w_ref, o_ref):
    # Fused prologue: train-mode BN apply + ReLU on the input tile (f32 math,
    # v5e-safe), then bf16 MXU matmul with f32 accumulate.
    x = x_ref[...].astype(jnp.float32) * sc_ref[...] + sh_ref[...]
    x = jnp.maximum(x, 0.0).astype(w_ref.dtype)
    o_ref[...] = jnp.dot(x, w_ref[...],
                         preferred_element_type=jnp.float32).astype(o_ref.dtype)


# ----------------------------- Pallas wrappers ------------------------------

def fused_head(noise, p):
    """netF + netG layer-1 + BN1 + ReLU in one pallas_call.

    Returns h1 as rows (B*16, 2*NGF) in bf16, channel-last (NHWC) order.
    Requires the whole batch in one block (fine for any realistic B here).
    """
    B = noise.shape[0]
    C1 = 2 * NGF
    ncol = K4 * K4 * C1                                      # 512

    # (nz; kh, kw, c) column order -> output reshapes directly to NHWC.
    w1 = p["g_w1"].transpose(0, 2, 3, 1).reshape(NZ, ncol)
    # ConvT bias (exactly cancelled by train-mode BN, kept for fidelity).
    b1 = jnp.tile(p["g_b1"], K4 * K4).reshape(1, ncol)
    chan = jnp.arange(ncol, dtype=jnp.int32) % C1
    pexp = (chan[None, :] == jnp.arange(C1, dtype=jnp.int32)[:, None]
            ).astype(jnp.float32)                            # (C1, ncol)
    ppool = pexp.T                                           # (ncol, C1)

    out = pl.pallas_call(
        functools.partial(_head_kernel, count=float(B * K4 * K4),
                          eps=BN_EPS, neg_slope=LRELU_SLOPE),
        out_shape=jax.ShapeDtypeStruct((B, ncol), jnp.bfloat16),
    )(noise.astype(jnp.float32),
      p["f_w1"].T, p["f_b1"].reshape(1, -1),
      p["f_w2"].T, p["f_b2"].reshape(1, -1),
      p["f_wmu"].T, p["f_bmu"].reshape(1, -1),
      w1, b1, ppool, pexp,
      p["g_bn1_g"].reshape(1, -1), p["g_bn1_b"].reshape(1, -1))
    # Row-major contiguous reshape (free): h1 rows in NHWC channel-last order.
    return out.reshape(B * K4 * K4, C1)


def _tiled_matmul_call(kernel, x, extra_rowvecs, w, out_dtype):
    """o = kernel(x[, rowvecs...], w), tiled over (M, N), full K per block.

    extra_rowvecs are (1, K) vectors broadcast over M (e.g. BN scale/shift).
    Both grid axes are 'parallel' (no resident accumulator) -> v7x megacore OK.
    """
    M, K = x.shape
    K2, N = w.shape
    assert K == K2
    tm, Mp = _plan(M, _TM, _MAX_FULL_M)
    tn, Np = _plan(N, _TN, _MAX_FULL_N)
    xb = x if Mp == M else jnp.pad(x, ((0, Mp - M), (0, 0)))
    wb = w if Np == N else jnp.pad(w, ((0, 0), (0, Np - N)))
    in_specs = [pl.BlockSpec((tm, K), lambda i, j: (i, 0))]
    in_specs += [pl.BlockSpec((1, K), lambda i, j: (0, 0)) for _ in extra_rowvecs]
    in_specs += [pl.BlockSpec((K, tn), lambda i, j: (0, j))]
    out = pl.pallas_call(
        kernel,
        out_shape=jax.ShapeDtypeStruct((Mp, Np), out_dtype),
        grid_spec=pltpu.PrefetchScalarGridSpec(
            num_scalar_prefetch=0,
            grid=(Mp // tm, Np // tn),
            in_specs=in_specs,
            out_specs=pl.BlockSpec((tm, tn), lambda i, j: (i, j)),
        ),
        compiler_params=pltpu.CompilerParams(
            dimension_semantics=("parallel", "parallel")),
    )(xb, *extra_rowvecs, wb)
    if Mp != M or Np != N:
        out = out[:M, :N]
    return out


def matmul(x, w, out_dtype=jnp.bfloat16):
    """o = x @ w  (bf16 operands, f32 accumulate, bf16 store)."""
    return _tiled_matmul_call(_mm_kernel, x, (), w, out_dtype)


def bn_relu_matmul(x, scale, shift, w, out_dtype=jnp.bfloat16):
    """o = relu(x * scale + shift) @ w  -- BN apply fused as matmul prologue."""
    K = x.shape[1]
    return _tiled_matmul_call(
        _bn_relu_mm_kernel, x,
        (scale.astype(jnp.float32).reshape(1, K),
         shift.astype(jnp.float32).reshape(1, K)),
        w, out_dtype)


# -------------------------- ConvTranspose plumbing --------------------------

def convt_weight_rows(w_t):
    """ConvTranspose2d weight (Cin, Cout, k, k) -> (Cin, k*k*Cout), columns
    ordered (kh, kw, cout), for the direct scatter / overlap-add formulation
    (no kernel flip needed)."""
    Cin, Cout, k, _ = w_t.shape
    return w_t.transpose(0, 2, 3, 1).reshape(Cin, k * k * Cout)


def convt_overlap_add(y_rows, B, H, Cout, k=K4, stride=2, pad=1):
    """Scatter per-pixel (k*k*Cout) matmul output into the upsampled map.

    out[b, stride*i+kh-pad, stride*j+kw-pad, c] += y[b,i,j,kh,kw,c]
    16 strided adds in XLA -- the mathematically minimal overlap-add traffic,
    no k^2 duplication of activations.
    # TODO(synk): could be a small Pallas scatter kernel; left to XLA per the
    # review's option (b) since it fuses and the tensors are small.
    """
    y = y_rows.astype(jnp.float32).reshape(B, H, H, k, k, Cout)
    ph = (H - 1) * stride + k
    oh = ph - 2 * pad
    buf = jnp.zeros((B, ph, ph, Cout), jnp.float32)
    for kh in range(k):
        for kw in range(k):
            buf = buf.at[:, kh:kh + stride * H:stride,
                            kw:kw + stride * H:stride, :].add(y[:, :, :, kh, kw, :])
    return buf[:, pad:pad + oh, pad:pad + oh, :]          # (B, oh, oh, Cout) NHWC


# ------------------------------- parameters --------------------------------

def init_params(key):
    def nrm(k, shape, std=0.05):
        return std * jax.random.normal(k, shape, jnp.float32)

    ks = jax.random.split(key, 12)
    p = {}
    # netF (MLP prior): returns (mu, logvar); extendedNetG consumes [0] = mu
    p["f_w1"] = nrm(ks[0], (NDF, NZ));  p["f_b1"] = jnp.zeros((NDF,), jnp.float32)
    p["f_w2"] = nrm(ks[1], (NDF, NDF)); p["f_b2"] = jnp.zeros((NDF,), jnp.float32)
    p["f_wmu"] = nrm(ks[2], (NZ, NDF)); p["f_bmu"] = jnp.zeros((NZ,), jnp.float32)
    p["f_wlv"] = nrm(ks[3], (NZ, NDF)); p["f_blv"] = jnp.zeros((NZ,), jnp.float32)
    # netG (DCGAN generator), ConvTranspose2d weight layout (Cin, Cout, k, k)
    p["g_w1"] = nrm(ks[4], (NZ, NGF * 2, K4, K4), 0.02)
    p["g_b1"] = jnp.zeros((NGF * 2,), jnp.float32)
    p["g_bn1_g"] = 1.0 + 0.02 * jax.random.normal(ks[5], (NGF * 2,), jnp.float32)
    p["g_bn1_b"] = jnp.zeros((NGF * 2,), jnp.float32)
    p["g_w2"] = nrm(ks[6], (NGF * 2, NGF, K4, K4), 0.02)
    p["g_b2"] = jnp.zeros((NGF,), jnp.float32)   # no-op under train-mode BN
    p["g_bn2_g"] = 1.0 + 0.02 * jax.random.normal(ks[7], (NGF,), jnp.float32)
    p["g_bn2_b"] = jnp.zeros((NGF,), jnp.float32)
    p["g_w3"] = nrm(ks[8], (NGF, NC, K4, K4), 0.02)
    p["g_b3"] = jnp.zeros((NC,), jnp.float32)
    return p


# -------------------------------- forward ----------------------------------

def extended_netG_forward(params, noise):
    """noise: (B, NZ) -> image (B, NC, 16, 16)   (PyTorch NCHW)"""
    p = params
    B = noise.shape[0]

    # netF + netG layer 1 + BN1 + ReLU, fused into one pallas_call.
    h1_rows = fused_head(noise, p)                          # (B*16, 32) bf16, NHWC

    # ---- netG layer 2: ConvT(2*NGF -> NGF, k4, s2, p1) + BN + ReLU -> 8x8
    # g_b2 is omitted: a per-channel constant is exactly cancelled by the
    # following train-mode BatchNorm.
    w2 = convt_weight_rows(p["g_w2"]).astype(jnp.bfloat16)  # (32, 256) lane-dense
    y2_rows = matmul(h1_rows, w2, out_dtype=jnp.bfloat16)   # (B*16, 256)
    h2_pre = convt_overlap_add(y2_rows, B, 4, NGF)          # (B, 8, 8, 16) f32
    mean2 = jnp.mean(h2_pre, axis=(0, 1, 2))
    var2 = jnp.maximum(jnp.mean(h2_pre * h2_pre, axis=(0, 1, 2)) - mean2 * mean2, 0.0)
    scale2 = p["g_bn2_g"] * jax.lax.rsqrt(var2 + BN_EPS)
    shift2 = p["g_bn2_b"] - mean2 * scale2

    # ---- netG layer 3: (BN2 apply + ReLU prologue) ConvT(NGF -> NC) -> 16x16
    h2_rows = h2_pre.reshape(B * 8 * 8, NGF).astype(jnp.bfloat16)
    w3 = convt_weight_rows(p["g_w3"]).astype(jnp.bfloat16)  # (16, 48)
    y3_rows = bn_relu_matmul(h2_rows, scale2, shift2, w3,
                             out_dtype=jnp.bfloat16)        # (B*64, 48)
    img_pre = convt_overlap_add(y3_rows, B, 8, NC)          # (B, 16, 16, 3) f32
    img = jnp.tanh(img_pre + p["g_b3"].reshape(1, 1, 1, NC))
    return img.transpose(0, 3, 1, 2)                        # NCHW


if __name__ == "__main__":
    key = jax.random.PRNGKey(0)
    pkey, nkey = jax.random.split(key)
    params = init_params(pkey)

    B = 2
    noise = jax.random.normal(nkey, (B, NZ), jnp.float32)

    out = jax.jit(extended_netG_forward)(params, noise)
    out = jax.block_until_ready(out)

    assert out.shape == (B, NC, 16, 16), out.shape
    assert out.dtype == jnp.float32
    assert bool(jnp.all(jnp.isfinite(out)))
    assert bool(jnp.all(jnp.abs(out) <= 1.0 + 1e-6))   # tanh output range
    print("KERNEL_OK")
</pallas_src>

<mosaic_0001>
module attributes {stable_mosaic.version = 11 : i64} {
  func.func @_head_kernel(%arg0: memref<2x16xf32, #tpu.memory_space<vmem>>, %arg1: memref<16x64xf32, #tpu.memory_space<vmem>>, %arg2: memref<1x64xf32, #tpu.memory_space<vmem>>, %arg3: memref<64x64xf32, #tpu.memory_space<vmem>>, %arg4: memref<1x64xf32, #tpu.memory_space<vmem>>, %arg5: memref<64x16xf32, #tpu.memory_space<vmem>>, %arg6: memref<1x16xf32, #tpu.memory_space<vmem>>, %arg7: memref<16x512xf32, #tpu.memory_space<vmem>>, %arg8: memref<1x512xf32, #tpu.memory_space<vmem>>, %arg9: memref<512x32xf32, #tpu.memory_space<vmem>>, %arg10: memref<32x512xf32, #tpu.memory_space<vmem>>, %arg11: memref<1x32xf32, #tpu.memory_space<vmem>>, %arg12: memref<1x32xf32, #tpu.memory_space<vmem>>, %arg13: memref<2x512xbf16, #tpu.memory_space<vmem>>) attributes {dimension_semantics = [], scalar_prefetch = 0 : i64, scratch_operands = 0 : i64, tpu.core_type = #tpu.core_type<tc>} {
    %c0 = arith.constant 0 : index
    %c0_0 = arith.constant 0 : index
    %0 = vector.load %arg0[%c0, %c0_0] : memref<2x16xf32, #tpu.memory_space<vmem>>, vector<2x16xf32>
    %c0_1 = arith.constant 0 : index
    %c0_2 = arith.constant 0 : index
    %1 = vector.load %arg1[%c0_1, %c0_2] : memref<16x64xf32, #tpu.memory_space<vmem>>, vector<16x64xf32>
    %cst = arith.constant dense<0.000000e+00> : vector<2x64xf32>
    %2 = tpu.matmul %0, %1, %cst {dimension_numbers = #tpu.dot_dimension_numbers<[1], [0], [0], [1], [0, 0, 1, 1], [], []>} : vector<2x16xf32>, vector<16x64xf32>, vector<2x64xf32> -> vector<2x64xf32>
    %c0_3 = arith.constant 0 : index
    %c0_4 = arith.constant 0 : index
    %3 = vector.load %arg2[%c0_3, %c0_4] : memref<1x64xf32, #tpu.memory_space<vmem>>, vector<1x64xf32>
    %4 = vector.broadcast %3 : vector<1x64xf32> to vector<2x64xf32>
    %5 = arith.addf %2, %4 : vector<2x64xf32>
    %cst_5 = arith.constant 0.000000e+00 : f32
    %6 = vector.broadcast %cst_5 : f32 to vector<2x64xf32>
    %7 = arith.cmpf ogt, %5, %6 : vector<2x64xf32>
    %cst_6 = arith.constant 2.000000e-01 : f32
    %8 = vector.broadcast %cst_6 : f32 to vector<2x64xf32>
    %9 = arith.mulf %8, %5 : vector<2x64xf32>
    %10 = arith.select %7, %5, %9 : vector<2x64xi1>, vector<2x64xf32>
    %c0_7 = arith.constant 0 : index
    %c0_8 = arith.constant 0 : index
    %11 = vector.load %arg3[%c0_7, %c0_8] : memref<64x64xf32, #tpu.memory_space<vmem>>, vector<64x64xf32>
    %cst_9 = arith.constant dense<0.000000e+00> : vector<2x64xf32>
    %12 = tpu.matmul %10, %11, %cst_9 {dimension_numbers = #tpu.dot_dimension_numbers<[1], [0], [0], [1], [0, 0, 1, 1], [], []>} : vector<2x64xf32>, vector<64x64xf32>, vector<2x64xf32> -> vector<2x64xf32>
    %c0_10 = arith.constant 0 : index
    %c0_11 = arith.constant 0 : index
    %13 = vector.load %arg4[%c0_10, %c0_11] : memref<1x64xf32, #tpu.memory_space<vmem>>, vector<1x64xf32>
    %14 = vector.broadcast %13 : vector<1x64xf32> to vector<2x64xf32>
    %15 = arith.addf %12, %14 : vector<2x64xf32>
    %cst_12 = arith.constant 0.000000e+00 : f32
    %16 = vector.broadcast %cst_12 : f32 to vector<2x64xf32>
    %17 = arith.cmpf ogt, %15, %16 : vector<2x64xf32>
    %cst_13 = arith.constant 2.000000e-01 : f32
    %18 = vector.broadcast %cst_13 : f32 to vector<2x64xf32>
    %19 = arith.mulf %18, %15 : vector<2x64xf32>
    %20 = arith.select %17, %15, %19 : vector<2x64xi1>, vector<2x64xf32>
    %c0_14 = arith.constant 0 : index
    %c0_15 = arith.constant 0 : index
    %21 = vector.load %arg5[%c0_14, %c0_15] : memref<64x16xf32, #tpu.memory_space<vmem>>, vector<64x16xf32>
    %cst_16 = arith.constant dense<0.000000e+00> : vector<2x16xf32>
    %22 = tpu.matmul %20, %21, %cst_16 {dimension_numbers = #tpu.dot_dimension_numbers<[1], [0], [0], [1], [0, 0, 1, 1], [], []>} : vector<2x64xf32>, vector<64x16xf32>, vector<2x16xf32> -> vector<2x16xf32>
    %c0_17 = arith.constant 0 : index
    %c0_18 = arith.constant 0 : index
    %23 = vector.load %arg6[%c0_17, %c0_18] : memref<1x16xf32, #tpu.memory_space<vmem>>, vector<1x16xf32>
    %24 = vector.broadcast %23 : vector<1x16xf32> to vector<2x16xf32>
    %25 = arith.addf %22, %24 : vector<2x16xf32>
    %c0_19 = arith.constant 0 : index
    %c0_20 = arith.constant 0 : index
    %26 = vector.load %arg7[%c0_19, %c0_20] : memref<16x512xf32, #tpu.memory_space<vmem>>, vector<16x512xf32>
    %cst_21 = arith.constant dense<0.000000e+00> : vector<2x512xf32>
    %27 = tpu.matmul %25, %26, %cst_21 {dimension_numbers = #tpu.dot_dimension_numbers<[1], [0], [0], [1], [0, 0, 1, 1], [], []>} : vector<2x16xf32>, vector<16x512xf32>, vector<2x512xf32> -> vector<2x512xf32>
    %c0_22 = arith.constant 0 : index
    %c0_23 = arith.constant 0 : index
    %28 = vector.load %arg8[%c0_22, %c0_23] : memref<1x512xf32, #tpu.memory_space<vmem>>, vector<1x512xf32>
    %29 = vector.broadcast %28 : vector<1x512xf32> to vector<2x512xf32>
    %30 = arith.addf %27, %29 : vector<2x512xf32>
    %cst_24 = arith.constant dense<0.000000e+00> : vector<512xf32>
    %31 = vector.multi_reduction <add>, %30, %cst_24 [0] : vector<2x512xf32> to vector<512xf32>
    %32 = vector.shape_cast %31 : vector<512xf32> to vector<1x512xf32>
    %33 = arith.mulf %30, %30 : vector<2x512xf32>
    %cst_25 = arith.constant dense<0.000000e+00> : vector<512xf32>
    %34 = vector.multi_reduction <add>, %33, %cst_25 [0] : vector<2x512xf32> to vector<512xf32>
    %35 = vector.shape_cast %34 : vector<512xf32> to vector<1x512xf32>
    %c0_26 = arith.constant 0 : index
    %c0_27 = arith.constant 0 : index
    %36 = vector.load %arg9[%c0_26, %c0_27] : memref<512x32xf32, #tpu.memory_space<vmem>>, vector<512x32xf32>
    %cst_28 = arith.constant dense<0.000000e+00> : vector<1x32xf32>
    %37 = tpu.matmul %32, %36, %cst_28 {dimension_numbers = #tpu.dot_dimension_numbers<[1], [0], [0], [1], [0, 0, 1, 1], [], []>} : vector<1x512xf32>, vector<512x32xf32>, vector<1x32xf32> -> vector<1x32xf32>
    %c0_29 = arith.constant 0 : index
    %c0_30 = arith.constant 0 : index
    %38 = vector.load %arg9[%c0_29, %c0_30] : memref<512x32xf32, #tpu.memory_space<vmem>>, vector<512x32xf32>
    %cst_31 = arith.constant dense<0.000000e+00> : vector<1x32xf32>
    %39 = tpu.matmul %35, %38, %cst_31 {dimension_numbers = #tpu.dot_dimension_numbers<[1], [0], [0], [1], [0, 0, 1, 1], [], []>} : vector<1x512xf32>, vector<512x32xf32>, vector<1x32xf32> -> vector<1x32xf32>
    %cst_32 = arith.constant 3.125000e-02 : f32
    %40 = vector.broadcast %cst_32 : f32 to vector<1x32xf32>
    %41 = arith.mulf %37, %40 : vector<1x32xf32>
    %cst_33 = arith.constant 3.125000e-02 : f32
    %42 = vector.broadcast %cst_33 : f32 to vector<1x32xf32>
    %43 = arith.mulf %39, %42 : vector<1x32xf32>
    %44 = arith.mulf %41, %41 : vector<1x32xf32>
    %45 = arith.subf %43, %44 : vector<1x32xf32>
    %cst_34 = arith.constant 0.000000e+00 : f32
    %46 = vector.broadcast %cst_34 : f32 to vector<1x32xf32>
    %47 = arith.maximumf %45, %46 : vector<1x32xf32>
    %c0_35 = arith.constant 0 : index
    %c0_36 = arith.constant 0 : index
    %48 = vector.load %arg11[%c0_35, %c0_36] : memref<1x32xf32, #tpu.memory_space<vmem>>, vector<1x32xf32>
    %cst_37 = arith.constant 9.99999974E-6 : f32
    %49 = vector.broadcast %cst_37 : f32 to vector<1x32xf32>
    %50 = arith.addf %47, %49 : vector<1x32xf32>
    %51 = math.rsqrt %50 : vector<1x32xf32>
    %52 = arith.mulf %48, %51 : vector<1x32xf32>
    %c0_38 = arith.constant 0 : index
    %c0_39 = arith.constant 0 : index
    %53 = vector.load %arg12[%c0_38, %c0_39] : memref<1x32xf32, #tpu.memory_space<vmem>>, vector<1x32xf32>
    %54 = arith.mulf %41, %52 : vector<1x32xf32>
    %55 = arith.subf %53, %54 : vector<1x32xf32>
    %c0_40 = arith.constant 0 : index
    %c0_41 = arith.constant 0 : index
    %56 = vector.load %arg10[%c0_40, %c0_41] : memref<32x512xf32, #tpu.memory_space<vmem>>, vector<32x512xf32>
    %cst_42 = arith.constant dense<0.000000e+00> : vector<1x512xf32>
    %57 = tpu.matmul %52, %56, %cst_42 {dimension_numbers = #tpu.dot_dimension_numbers<[1], [0], [0], [1], [0, 0, 1, 1], [], []>} : vector<1x32xf32>, vector<32x512xf32>, vector<1x512xf32> -> vector<1x512xf32>
    %c0_43 = arith.constant 0 : index
    %c0_44 = arith.constant 0 : index
    %58 = vector.load %arg10[%c0_43, %c0_44] : memref<32x512xf32, #tpu.memory_space<vmem>>, vector<32x512xf32>
    %cst_45 = arith.constant dense<0.000000e+00> : vector<1x512xf32>
    %59 = tpu.matmul %55, %58, %cst_45 {dimension_numbers = #tpu.dot_dimension_numbers<[1], [0], [0], [1], [0, 0, 1, 1], [], []>} : vector<1x32xf32>, vector<32x512xf32>, vector<1x512xf32> -> vector<1x512xf32>
    %60 = vector.broadcast %57 : vector<1x512xf32> to vector<2x512xf32>
    %61 = arith.mulf %30, %60 : vector<2x512xf32>
    %62 = vector.broadcast %59 : vector<1x512xf32> to vector<2x512xf32>
    %63 = arith.addf %61, %62 : vector<2x512xf32>
    %cst_46 = arith.constant 0.000000e+00 : f32
    %64 = vector.broadcast %cst_46 : f32 to vector<2x512xf32>
    %65 = arith.maximumf %63, %64 : vector<2x512xf32>
    %66 = arith.truncf %65 : vector<2x512xf32> to vector<2x512xbf16>
    %c0_47 = arith.constant 0 : index
    %c0_48 = arith.constant 0 : index
    %67 = vector.load %arg13[%c0_47, %c0_48] : memref<2x512xbf16, #tpu.memory_space<vmem>>, vector<2x512xbf16>
    tpu.vector_store %arg13[%c0_47, %c0_48], %66 {strides = array<i32>} : memref<2x512xbf16, #tpu.memory_space<vmem>>, vector<2x512xbf16>,
    return
  }
}

module attributes {stable_mosaic.version = 11 : i64} {
  func.func @_mm_kernel(%arg0: i32, %arg1: i32, %arg2: memref<32x32xbf16, #tpu.memory_space<vmem>>, %arg3: memref<32x256xbf16, #tpu.memory_space<vmem>>, %arg4: memref<32x256xbf16, #tpu.memory_space<vmem>>) attributes {dimension_semantics = [#tpu.dimension_semantics<parallel>, #tpu.dimension_semantics<parallel>], iteration_bounds = array<i64: 1, 1>, scalar_prefetch = 0 : i64, scratch_operands = 0 : i64, tpu.core_type = #tpu.core_type<tc>, window_params = [{transform_indices = @transform_0, window_bounds = array<i64: 32, 32>}, {transform_indices = @transform_1, window_bounds = array<i64: 32, 256>}, {transform_indices = @transform_2, window_bounds = array<i64: 32, 256>}]} {
    %c0 = arith.constant 0 : index
    %c0_0 = arith.constant 0 : index
    %0 = vector.load %arg2[%c0, %c0_0] : memref<32x32xbf16, #tpu.memory_space<vmem>>, vector<32x32xbf16>
    %c0_1 = arith.constant 0 : index
    %c0_2 = arith.constant 0 : index
    %1 = vector.load %arg3[%c0_1, %c0_2] : memref<32x256xbf16, #tpu.memory_space<vmem>>, vector<32x256xbf16>
    %cst = arith.constant dense<0.000000e+00> : vector<32x256xf32>
    %2 = tpu.matmul %0, %1, %cst {dimension_numbers = #tpu.dot_dimension_numbers<[1], [0], [0], [1], [0, 0, 1, 1], [], []>} : vector<32x32xbf16>, vector<32x256xbf16>, vector<32x256xf32> -> vector<32x256xf32>
    %3 = arith.truncf %2 : vector<32x256xf32> to vector<32x256xbf16>
    %c0_3 = arith.constant 0 : index
    %c0_4 = arith.constant 0 : index
    %4 = vector.load %arg4[%c0_3, %c0_4] : memref<32x256xbf16, #tpu.memory_space<vmem>>, vector<32x256xbf16>
    tpu.vector_store %arg4[%c0_3, %c0_4], %3 {strides = array<i32>} : memref<32x256xbf16, #tpu.memory_space<vmem>>, vector<32x256xbf16>,
    return
  }
  func.func @transform_0(%arg0: i32, %arg1: i32) -> (i32, i32) {
    %c0_i32 = arith.constant 0 : i32
    %c0_i32_0 = arith.constant 0 : i32
    return %arg0, %c0_i32 : i32, i32
  }
  func.func @transform_1(%arg0: i32, %arg1: i32) -> (i32, i32) {
    %c0_i32 = arith.constant 0 : i32
    %c0_i32_0 = arith.constant 0 : i32
    return %c0_i32, %arg1 : i32, i32
  }
  func.func @transform_2(%arg0: i32, %arg1: i32) -> (i32, i32) {
    %c0_i32 = arith.constant 0 : i32
    return %arg0, %arg1 : i32, i32
  }
}

module attributes {stable_mosaic.version = 11 : i64} {
  func.func @_bn_relu_mm_kernel(%arg0: i32, %arg1: i32, %arg2: memref<128x16xbf16, #tpu.memory_space<vmem>>, %arg3: memref<1x16xf32, #tpu.memory_space<vmem>>, %arg4: memref<1x16xf32, #tpu.memory_space<vmem>>, %arg5: memref<16x48xbf16, #tpu.memory_space<vmem>>, %arg6: memref<128x48xbf16, #tpu.memory_space<vmem>>) attributes {dimension_semantics = [#tpu.dimension_semantics<parallel>, #tpu.dimension_semantics<parallel>], iteration_bounds = array<i64: 1, 1>, scalar_prefetch = 0 : i64, scratch_operands = 0 : i64, tpu.core_type = #tpu.core_type<tc>, window_params = [{transform_indices = @transform_0, window_bounds = array<i64: 128, 16>}, {pipeline_mode = #tpu.pipeline_mode<synchronous>, transform_indices = @transform_1, window_bounds = array<i64: 1, 16>}, {pipeline_mode = #tpu.pipeline_mode<synchronous>, transform_indices = @transform_2, window_bounds = array<i64: 1, 16>}, {transform_indices = @transform_3, window_bounds = array<i64: 16, 48>}, {transform_indices = @transform_4, window_bounds = array<i64: 128, 48>}]} {
    %c0 = arith.constant 0 : index
    %c0_0 = arith.constant 0 : index
    %0 = vector.load %arg2[%c0, %c0_0] : memref<128x16xbf16, #tpu.memory_space<vmem>>, vector<128x16xbf16>
    %1 = arith.extf %0 : vector<128x16xbf16> to vector<128x16xf32>
    %c0_1 = arith.constant 0 : index
    %c0_2 = arith.constant 0 : index
    %2 = vector.load %arg3[%c0_1, %c0_2] : memref<1x16xf32, #tpu.memory_space<vmem>>, vector<1x16xf32>
    %3 = vector.broadcast %2 : vector<1x16xf32> to vector<128x16xf32>
    %4 = arith.mulf %1, %3 : vector<128x16xf32>
    %c0_3 = arith.constant 0 : index
    %c0_4 = arith.constant 0 : index
    %5 = vector.load %arg4[%c0_3, %c0_4] : memref<1x16xf32, #tpu.memory_space<vmem>>, vector<1x16xf32>
    %6 = vector.broadcast %5 : vector<1x16xf32> to vector<128x16xf32>
    %7 = arith.addf %4, %6 : vector<128x16xf32>
    %cst = arith.constant 0.000000e+00 : f32
    %8 = vector.broadcast %cst : f32 to vector<128x16xf32>
    %9 = arith.maximumf %7, %8 : vector<128x16xf32>
    %10 = arith.truncf %9 : vector<128x16xf32> to vector<128x16xbf16>
    %c0_5 = arith.constant 0 : index
    %c0_6 = arith.constant 0 : index
    %11 = vector.load %arg5[%c0_5, %c0_6] : memref<16x48xbf16, #tpu.memory_space<vmem>>, vector<16x48xbf16>
    %cst_7 = arith.constant dense<0.000000e+00> : vector<128x48xf32>
    %12 = tpu.matmul %10, %11, %cst_7 {dimension_numbers = #tpu.dot_dimension_numbers<[1], [0], [0], [1], [0, 0, 1, 1], [], []>} : vector<128x16xbf16>, vector<16x48xbf16>, vector<128x48xf32> -> vector<128x48xf32>
    %13 = arith.truncf %12 : vector<128x48xf32> to vector<128x48xbf16>
    %c0_8 = arith.constant 0 : index
    %c0_9 = arith.constant 0 : index
    %14 = vector.load %arg6[%c0_8, %c0_9] : memref<128x48xbf16, #tpu.memory_space<vmem>>, vector<128x48xbf16>
    tpu.vector_store %arg6[%c0_8, %c0_9], %13 {strides = array<i32>} : memref<128x48xbf16, #tpu.memory_space<vmem>>, vector<128x48xbf16>,
    return
  }
  func.func @transform_0(%arg0: i32, %arg1: i32) -> (i32, i32) {
    %c0_i32 = arith.constant 0 : i32
    %c0_i32_0 = arith.constant 0 : i32
    return %arg0, %c0_i32 : i32, i32
  }
  func.func @transform_1(%arg0: i32, %arg1: i32) -> (i32, i32) {
    %c0_i32 = arith.constant 0 : i32
    %c0_i32_0 = arith.constant 0 : i32
    %c0_i32_1 = arith.constant 0 : i32
    return %c0_i32, %c0_i32_0 : i32, i32
  }
  func.func @transform_2(%arg0: i32, %arg1: i32) -> (i32, i32) {
    %c0_i32 = arith.constant 0 : i32
    %c0_i32_0 = arith.constant 0 : i32
    %c0_i32_1 = arith.constant 0 : i32
    return %c0_i32, %c0_i32_0 : i32, i32
  }
  func.func @transform_3(%arg0: i32, %arg1: i32) -> (i32, i32) {
    %c0_i32 = arith.constant 0 : i32
    %c0_i32_0 = arith.constant 0 : i32
    return %c0_i32, %arg1 : i32, i32
  }
  func.func @transform_4(%arg0: i32, %arg1: i32) -> (i32, i32) {
    %c0_i32 = arith.constant 0 : i32
    return %arg0, %arg1 : i32, i32
  }
}

</mosaic_0001>

<llo_original>
// kernel: tile.8
$region0: #{tile.8}
  #allocation0 [shape = 's32[1]{0}', space=sflag, size = 0x4, scoped, tag = 'scoped memory for tile.8']
  %s0 = inlined_call_operand.vmem [shape: f32[32], index: 0, kind: input, shape index: {}]
  %s1 = inlined_call_operand.vmem [shape: f32[16,32], index: 1, kind: output, shape index: {}]
  // Predicated region
  $region2: #{tile.8} parent=0 // pred_check
    _
  $region3: #{tile.8} parent=0 // pred_check_branch
    %3 = sbr.rel (0) target = $region5
  $region4: #{tile.8} parent=0 // pred_region
    _
  $region5: #{tile.8} parent=0 // pred_fallthru
    _
  %v4 = vld [vmem:[%s0] ss:$0 sm:$0xff]
  %5 = vst [vmem:[%s1] sm:$0xff] %v4
  %s6 = scalar_lea.vmem %s1, 8
  %7 = vst [vmem:[%s6] sm:$0xff] %v4

// kernel: tile.9
$region0: #{tile.9}
  %s0 = inlined_call_operand.vmem [shape: f32[16,32], index: 0, kind: input, shape index: {}]
  %s1 = inlined_call_operand.vmem [shape: f32[1,512], index: 1, kind: output, shape index: {}]
  $region1: #{tile.9} parent=0
    #allocation0 [shape = 'u8[16384]{0}', space=vmem, size = 0x4000, scoped, tag = 'scoped mem for output reshape']
    %v2 = vld [vmem:[%s0] ss:$4 sm:$0xf]
    %vm3 = vcmask 261120
    %4 = vst.msk [vmem:[#allocation0] ss:$8 sm:$0xf] %vm3, %v2
    %s5 = scalar_lea.vmem %s0, 3
    %v6 = vld [vmem:[%s5] ss:$4 sm:$0xf]
    %7 = vrot.lane.b32.xlu0 %v6, 96
    %v8 = vpop.permute.xlu0 %7
    %vm9 = vcmask 1048320
    %10 = vst.msk [vmem:[#allocation0] ss:$8 sm:$0xf] %vm9, %v8
    %s11 = scalar_lea.vmem %s0, 2
    %v12 = vld [vmem:[%s11] ss:$4 sm:$0xf]
    %13 = vrot.lane.b32.xlu0 %v12, 64
    %v14 = vpop.permute.xlu0 %13
    %vm15 = vcmask 785920
    %16 = vst.msk [vmem:[#allocation0] ss:$8 sm:$0xf] %vm15, %v14
    %s17 = scalar_lea.vmem %s0, 1
    %v18 = vld [vmem:[%s17] ss:$4 sm:$0xf]
    %19 = vrot.lane.b32.xlu0 %v18, 32
    %v20 = vpop.permute.xlu0 %19
    %vm21 = vcmask 523520
    %22 = vst.msk [vmem:[#allocation0] ss:$8 sm:$0xf] %vm21, %v20
    %s24 = sshllo.u32 0, 1
    %v26 = vld [vmem:[#allocation0] sm:%s24]
    %s27 = sshllo.u32 0, 1
    %28 = vst [vmem:[%s1] sm:%s27] %v26
    %s29 = scalar_lea.vmem [#allocation0], 8
    %v30 = vld [vmem:[%s29] sm:%s24]
    %s31 = sshllo.u32 0, 1
    %s32 = scalar_lea.vmem %s1, 1
    %33 = vst [vmem:[%s32] sm:%s31] %v30
    %s34 = scalar_lea.vmem [#allocation0], 16
    %v35 = vld [vmem:[%s34] sm:%s24]
    %s36 = sshllo.u32 0, 1
    %s37 = smul.addr 1, 2
    %s38 = scalar_lea.vmem %s1, %s37
    %39 = vst [vmem:[%s38] sm:%s36] %v35
    %s40 = scalar_lea.vmem [#allocation0], 24
    %v41 = vld [vmem:[%s40] sm:%s24]
    %s42 = sshllo.u32 0, 1
    %s43 = smul.addr 1, 3
    %s44 = scalar_lea.vmem %s1, %s43
    %45 = vst [vmem:[%s44] sm:%s42] %v41

// kernel: extended_netG_forward.4
$region0: #{extended_netG_forward.4}
  #allocation0 [shape = 'u32[]', space=smem, size = 0x4, offset = 0x4, fixed_abs, tag = 'smem constant byte address 0x4 - core index']
  #allocation1 [shape = 'u32[144,128]{1,0:T(1,128)}', space=vmem, size = 0x12000, scoped, tag = 'internal scratch']
  %s0 = inlined_call_operand.vmem [shape: bf16[32,32], index: 0, kind: input, shape index: {}]
  %s1 = inlined_call_operand.vmem [shape: bf16[32,256], index: 1, kind: input, shape index: {}]
  %s2 = inlined_call_operand.vmem [shape: bf16[32,256], index: 2, kind: output, shape index: {}]
  %s3 = sld [smem:[#allocation0]]
  $region18: #{extended_netG_forward.4} parent=0
    _
  %s5 = ssub.s32 1, %s3
  %s6 = scalar_select 0, %s5, %s3
  // Predicated region
  $region2: #{extended_netG_forward.4} parent=0 // pred_check
    _
  $region3: #{extended_netG_forward.4} parent=0 // pred_check_branch
    %8 = sbr.rel (0) target = $region5
  $region4: #{extended_netG_forward.4} parent=0 // pred_region
    _
  $region5: #{extended_netG_forward.4} parent=0 // pred_fallthru
    _
  // Predicated region
  $region6: #{extended_netG_forward.4} parent=0 // pred_check
    _
  $region7: #{extended_netG_forward.4} parent=0 // pred_check_branch
    %10 = sbr.rel (0) target = $region9
  $region8: #{extended_netG_forward.4} parent=0 // pred_region
    _
  $region9: #{extended_netG_forward.4} parent=0 // pred_fallthru
    _
  %v12 = vld [vmem:[%s0] sm:$0xf]
  %v13 = vld [vmem:[%s0 + $0x4] sm:$0xf]
  %v14 = vld [vmem:[%s0 + $0x8] sm:$0xf]
  %v15 = vld [vmem:[%s0 + $0xc] sm:$0xf]
  %v16 = vld [vmem:[%s1] sm:$0xff]
  %v17 = vld [vmem:[%s1 + $0x8] sm:$0xff]
  %v18 = vld [vmem:[%s1 + $0x10] sm:$0xff]
  %v19 = vld [vmem:[%s1 + $0x18] sm:$0xff]
  %v24 = vunpack.c.l.b16 %v12
  %v25 = vunpack.c.l.b16 %v13
  %v26 = vunpack.c.l.b16 %v14
  %v27 = vunpack.c.l.b16 %v15
  %v28 = vpack.c.b16 %v25, %v24
  %v29 = vpack.c.b16 %v27, %v26
  %v34 = vunpack.c.l.b16 %v16
  %v35 = vunpack.c.h.b16 %v16
  %v36 = vunpack.c.l.b16 %v17
  %v37 = vunpack.c.h.b16 %v17
  %v38 = vunpack.c.l.b16 %v18
  %v39 = vunpack.c.h.b16 %v18
  %v40 = vunpack.c.l.b16 %v19
  %v41 = vunpack.c.h.b16 %v19
  %v42 = vpack.c.b16 %v36, %v34
  %v43 = vpack.c.b16 %v37, %v35
  %v44 = vpack.c.b16 %v40, %v38
  %v45 = vpack.c.b16 %v41, %v39
  %vm50 = vcmask 261120
  %v52 = vsel %vm50, %v28, 0
  %v55 = vsel %vm50, %v29, 0
  %57 = vmatprep.subr.bf16.mxu0 %v43
  %58 = vmatpush1.bf16.msra.mxu0 %v42
  %59 = vmatprep.subr.bf16.mxu0 %v45
  %60 = vmatpush1.bf16.msra.mxu0 %v44
  %61 = vmatprep.subr.bf16.mxu0 0
  %62 = vmatpush1.bf16.msra.mxu0 0
  %63 = vmatprep.subr.bf16.mxu0 0
  %64 = vmatpush1.bf16.msra.mxu0 0
  %65 = vmatprep.subr.bf16.mxu0 0
  %66 = vmatpush1.bf16.msra.mxu0 0
  %67 = vmatprep.subr.bf16.mxu0 0
  %68 = vmatpush1.bf16.msra.mxu0 0
  %69 = vmatprep.subr.bf16.mxu0 0
  %70 = vmatpush1.bf16.msra.mxu0 0
  %71 = vmatprep.subr.bf16.mxu0 0
  %72 = vmatpush1.bf16.msra.mxu0 0
  %73 = vmatprep.subr.bf16.mxu0 0
  %74 = vmatpush1.bf16.msra.mxu0 0
  %75 = vmatprep.subr.bf16.mxu0 0
  %76 = vmatpush1.bf16.msra.mxu0 0
  %77 = vmatprep.subr.bf16.mxu0 0
  %78 = vmatpush1.bf16.msra.mxu0 0
  %79 = vmatprep.subr.bf16.mxu0 0
  %80 = vmatpush1.bf16.msra.mxu0 0
  %81 = vmatprep.subr.bf16.mxu0 0
  %82 = vmatpush1.bf16.msra.mxu0 0
  %83 = vmatprep.subr.bf16.mxu0 0
  %84 = vmatpush1.bf16.msra.mxu0 0
  %85 = vmatprep.subr.bf16.mxu0 0
  %86 = vmatpush1.bf16.msra.mxu0 0
  %87 = vmatprep.subr.bf16.mxu0 0
  %88 = vmatpush1.bf16.msra.mxu0 0
  %89 = vmatprep.mubr.bf16.mxu0 0
  %90 = vmatmul.mubr.bf16.gmra.mrb[0].mxu0 %v52
  %v91 = vpop.f32.mrb[0].mxu0
  %v92 = vadd.f32 0.0, %v91
  %v93 = vpop.f32.mrb[0].mxu0
  %v94 = vadd.f32 0.0, %v93
  %v95 = vpop.f32.mrb[0].mxu0
  %v96 = vadd.f32 0.0, %v95
  %v97 = vpop.f32.mrb[0].mxu0
  %v98 = vadd.f32 0.0, %v97
  %99 = vmatprep.mubr.bf16.mxu0 0
  %100 = vmatmul.mubr.bf16.gmra.mrb[0].mxu0 %v55
  %v101 = vpop.f32.mrb[0].mxu0
  %v102 = vadd.f32 0.0, %v101
  %v103 = vpop.f32.mrb[0].mxu0
  %v104 = vadd.f32 0.0, %v103
  %v105 = vpop.f32.mrb[0].mxu0
  %v106 = vadd.f32 0.0, %v105
  %v107 = vpop.f32.mrb[0].mxu0
  %v108 = vadd.f32 0.0, %v107
  %109 = vdwg.mxu0
  %v110 = vpack.c.bf16 %v96, %v92
  %v111 = vpack.c.bf16 %v98, %v94
  %v112 = vpack.c.bf16 %v106, %v102
  %v113 = vpack.c.bf16 %v108, %v104
  %v118 = vunpack.c.l.b16 %v110
  %v119 = vunpack.c.l.b16 %v111
  %v120 = vunpack.c.h.b16 %v110
  %v121 = vunpack.c.h.b16 %v111
  %v122 = vunpack.c.l.b16 %v112
  %v123 = vunpack.c.l.b16 %v113
  %v124 = vunpack.c.h.b16 %v112
  %v125 = vunpack.c.h.b16 %v113
  %v126 = vpack.c.b16 %v119, %v118
  %v127 = vpack.c.b16 %v121, %v120
  %v128 = vpack.c.b16 %v123, %v122
  %v129 = vpack.c.b16 %v125, %v124
  %134 = vst [vmem:[%s2] sm:$0xff] %v126
  %135 = vst [vmem:[%s2 + $0x8] sm:$0xff] %v127
  %136 = vst [vmem:[%s2 + $0x10] sm:$0xff] %v128
  %137 = vst [vmem:[%s2 + $0x18] sm:$0xff] %v129
  // Predicated region
  $region10: #{extended_netG_forward.4} parent=0 // pred_check
    _
  $region11: #{extended_netG_forward.4} parent=0 // pred_check_branch
    %139 = sbr.rel (0) target = $region13
  $region12: #{extended_netG_forward.4} parent=0 // pred_region
    _
  $region13: #{extended_netG_forward.4} parent=0 // pred_fallthru
    _
  // Predicated region
  $region14: #{extended_netG_forward.4} parent=0 // pred_check
    _
  $region15: #{extended_netG_forward.4} parent=0 // pred_check_branch
    %141 = sbr.rel (0) target = $region17
  $region16: #{extended_netG_forward.4} parent=0 // pred_region
    _
  $region17: #{extended_netG_forward.4} parent=0 // pred_fallthru
    _

// kernel: extended_netG_forward.3
$region0: #{extended_netG_forward.3}
  #allocation0 [shape = 'u32[]', space=smem, size = 0x4, offset = 0x4, fixed_abs, tag = 'smem constant byte address 0x4 - core index']
  #allocation1 [shape = 'u32[144,128]{1,0:T(1,128)}', space=vmem, size = 0x12000, scoped, tag = 'internal scratch']
  %s0 = inlined_call_operand.vmem [shape: f32[2,16], index: 0, kind: input, shape index: {}]
  %s1 = inlined_call_operand.vmem [shape: f32[16,64], index: 1, kind: input, shape index: {}]
  %s2 = inlined_call_operand.vmem [shape: f32[1,64], index: 2, kind: input, shape index: {}]
  %s3 = inlined_call_operand.vmem [shape: f32[64,64], index: 3, kind: input, shape index: {}]
  %s4 = inlined_call_operand.vmem [shape: f32[1,64], index: 4, kind: input, shape index: {}]
  %s5 = inlined_call_operand.vmem [shape: f32[64,16], index: 5, kind: input, shape index: {}]
  %s6 = inlined_call_operand.vmem [shape: f32[1,16], index: 6, kind: input, shape index: {}]
  %s7 = inlined_call_operand.vmem [shape: f32[16,512], index: 7, kind: input, shape index: {}]
  %s8 = inlined_call_operand.vmem [shape: f32[1,512], index: 8, kind: input, shape index: {}]
  %s9 = inlined_call_operand.vmem [shape: f32[512,32], index: 9, kind: input, shape index: {}]
  %s10 = inlined_call_operand.vmem [shape: f32[32,512], index: 10, kind: input, shape index: {}]
  %s11 = inlined_call_operand.vmem [shape: f32[1,32], index: 11, kind: input, shape index: {}]
  %s12 = inlined_call_operand.vmem [shape: f32[1,32], index: 12, kind: input, shape index: {}]
  %s13 = inlined_call_operand.vmem [shape: bf16[2,512], index: 13, kind: output, shape index: {}]
  %s14 = sld [smem:[#allocation0]]
  $region62: #{extended_netG_forward.3} parent=0
    _
  %s16 = ssub.s32 1, %s14
  %s17 = scalar_select 0, %s16, %s14
  // Predicated region
  $region2: #{extended_netG_forward.3} parent=0 // pred_check
    _
  $region3: #{extended_netG_forward.3} parent=0 // pred_check_branch
    %19 = sbr.rel (0) target = $region5
  $region4: #{extended_netG_forward.3} parent=0 // pred_region
    _
  $region5: #{extended_netG_forward.3} parent=0 // pred_fallthru
    _
  // Predicated region
  $region6: #{extended_netG_forward.3} parent=0 // pred_check
    _
  $region7: #{extended_netG_forward.3} parent=0 // pred_check_branch
    %21 = sbr.rel (0) target = $region9
  $region8: #{extended_netG_forward.3} parent=0 // pred_region
    _
  $region9: #{extended_netG_forward.3} parent=0 // pred_fallthru
    _
  // Predicated region
  $region10: #{extended_netG_forward.3} parent=0 // pred_check
    _
  $region11: #{extended_netG_forward.3} parent=0 // pred_check_branch
    %23 = sbr.rel (0) target = $region13
  $region12: #{extended_netG_forward.3} parent=0 // pred_region
    _
  $region13: #{extended_netG_forward.3} parent=0 // pred_fallthru
    _
  // Predicated region
  $region14: #{extended_netG_forward.3} parent=0 // pred_check
    _
  $region15: #{extended_netG_forward.3} parent=0 // pred_check_branch
    %25 = sbr.rel (0) target = $region17
  $region16: #{extended_netG_forward.3} parent=0 // pred_region
    _
  $region17: #{extended_netG_forward.3} parent=0 // pred_fallthru
    _
  // Predicated region
  $region18: #{extended_netG_forward.3} parent=0 // pred_check
    _
  $region19: #{extended_netG_forward.3} parent=0 // pred_check_branch
    %27 = sbr.rel (0) target = $region21
  $region20: #{extended_netG_forward.3} parent=0 // pred_region
    _
  $region21: #{extended_netG_forward.3} parent=0 // pred_fallthru
    _
  // Predicated region
  $region22: #{extended_netG_forward.3} parent=0 // pred_check
    _
  $region23: #{extended_netG_forward.3} parent=0 // pred_check_branch
    %29 = sbr.rel (0) target = $region25
  $region24: #{extended_netG_forward.3} parent=0 // pred_region
    _
  $region25: #{extended_netG_forward.3} parent=0 // pred_fallthru
    _
  // Predicated region
  $region26: #{extended_netG_forward.3} parent=0 // pred_check
    _
  $region27: #{extended_netG_forward.3} parent=0 // pred_check_branch
    %31 = sbr.rel (0) target = $region29
  $region28: #{extended_netG_forward.3} parent=0 // pred_region
    _
  $region29: #{extended_netG_forward.3} parent=0 // pred_fallthru
    _
  // Predicated region
  $region30: #{extended_netG_forward.3} parent=0 // pred_check
    _
  $region31: #{extended_netG_forward.3} parent=0 // pred_check_branch
    %33 = sbr.rel (0) target = $region33
  $region32: #{extended_netG_forward.3} parent=0 // pred_region
    _
  $region33: #{extended_netG_forward.3} parent=0 // pred_fallthru
    _
  // Predicated region
  $region34: #{extended_netG_forward.3} parent=0 // pred_check
    _
  $region35: #{extended_netG_forward.3} parent=0 // pred_check_branch
    %35 = sbr.rel (0) target = $region37
  $region36: #{extended_netG_forward.3} parent=0 // pred_region
    _
  $region37: #{extended_netG_forward.3} parent=0 // pred_fallthru
    _
  // Predicated region
  $region38: #{extended_netG_forward.3} parent=0 // pred_check
    _
  $region39: #{extended_netG_forward.3} parent=0 // pred_check_branch
    %37 = sbr.rel (0) target = $region41
  $region40: #{extended_netG_forward.3} parent=0 // pred_region
    _
  $region41: #{extended_netG_forward.3} parent=0 // pred_fallthru
    _
  // Predicated region
  $region42: #{extended_netG_forward.3} parent=0 // pred_check
    _
  $region43: #{extended_netG_forward.3} parent=0 // pred_check_branch
    %39 = sbr.rel (0) target = $region45
  $region44: #{extended_netG_forward.3} parent=0 // pred_region
    _
  $region45: #{extended_netG_forward.3} parent=0 // pred_fallthru
    _
  // Predicated region
  $region46: #{extended_netG_forward.3} parent=0 // pred_check
    _
  $region47: #{extended_netG_forward.3} parent=0 // pred_check_branch
    %41 = sbr.rel (0) target = $region49
  $region48: #{extended_netG_forward.3} parent=0 // pred_region
    _
  $region49: #{extended_netG_forward.3} parent=0 // pred_fallthru
    _
  // Predicated region
  $region50: #{extended_netG_forward.3} parent=0 // pred_check
    _
  $region51: #{extended_netG_forward.3} parent=0 // pred_check_branch
    %43 = sbr.rel (0) target = $region53
  $region52: #{extended_netG_forward.3} parent=0 // pred_region
    _
  $region53: #{extended_netG_forward.3} parent=0 // pred_fallthru
    _
  %v44 = vld [vmem:[%s0] sm:$0x3]
  %v45 = vld [vmem:[%s1] sm:$0xff]
  %v46 = vld [vmem:[%s1 + $0x8] sm:$0xff]
  %v47 = vld [vmem:[%s2] sm:$0x1]
  %v49 = vlaneseq
  %v50 = vshrl.u32 %v49, 7
  %v51 = vsub.s32 0, %v50
  %v52 = vrot.slane %v47, %v51
  %vm54 = vcmask 130048
  %v56 = vsel %vm54, %v44, 0
  %58 = vmatprep.subr.mxu0 0.0
  %59 = vmatpush1.msra.mxu0 %v45
  %60 = vmatprep.subr.mxu0 0.0
  %61 = vmatpush1.msra.mxu0 %v46
  %62 = vmatprep.subr.mxu0 0.0
  %63 = vmatpush1.msra.mxu0 0.0
  %64 = vmatprep.subr.mxu0 0.0
  %65 = vmatpush1.msra.mxu0 0.0
  %66 = vmatprep.subr.mxu0 0.0
  %67 = vmatpush1.msra.mxu0 0.0
  %68 = vmatprep.subr.mxu0 0.0
  %69 = vmatpush1.msra.mxu0 0.0
  %70 = vmatprep.subr.mxu0 0.0
  %71 = vmatpush1.msra.mxu0 0.0
  %72 = vmatprep.subr.mxu0 0.0
  %73 = vmatpush1.msra.mxu0 0.0
  %74 = vmatprep.subr.mxu0 0.0
  %75 = vmatpush1.msra.mxu0 0.0
  %76 = vmatprep.subr.mxu0 0.0
  %77 = vmatpush1.msra.mxu0 0.0
  %78 = vmatprep.subr.mxu0 0.0
  %79 = vmatpush1.msra.mxu0 0.0
  %80 = vmatprep.subr.mxu0 0.0
  %81 = vmatpush1.msra.mxu0 0.0
  %82 = vmatprep.subr.mxu0 0.0
  %83 = vmatpush1.msra.mxu0 0.0
  %84 = vmatprep.subr.mxu0 0.0
  %85 = vmatpush1.msra.mxu0 0.0
  %86 = vmatprep.subr.mxu0 0.0
  %87 = vmatpush1.msra.mxu0 0.0
  %88 = vmatprep.subr.mxu0 0.0
  %89 = vmatpush1.msra.mxu0 0.0
  %90 = vmatprep.subr.mxu0 0.0
  %91 = vmatpush1.msra.mxu0 0.0
  %92 = vmatprep.subr.mxu0 0.0
  %93 = vmatpush1.msra.mxu0 0.0
  %94 = vmatprep.subr.mxu0 0.0
  %95 = vmatpush1.msra.mxu0 0.0
  %96 = vmatprep.subr.mxu0 0.0
  %97 = vmatpush1.msra.mxu0 0.0
  %98 = vmatprep.subr.mxu0 0.0
  %99 = vmatpush1.msra.mxu0 0.0
  %100 = vmatprep.subr.mxu0 0.0
  %101 = vmatpush1.msra.mxu0 0.0
  %102 = vmatprep.subr.mxu0 0.0
  %103 = vmatpush1.msra.mxu0 0.0
  %104 = vmatprep.subr.mxu0 0.0
  %105 = vmatpush1.msra.mxu0 0.0
  %106 = vmatprep.subr.mxu0 0.0
  %107 = vmatpush1.msra.mxu0 0.0
  %108 = vmatprep.subr.mxu0 0.0
  %109 = vmatpush1.msra.mxu0 0.0
  %110 = vmatprep.subr.mxu0 0.0
  %111 = vmatpush1.msra.mxu0 0.0
  %112 = vmatprep.subr.mxu0 0.0
  %113 = vmatpush1.msra.mxu0 0.0
  %114 = vmatprep.subr.mxu0 0.0
  %115 = vmatpush1.msra.mxu0 0.0
  %116 = vmatprep.subr.mxu0 0.0
  %117 = vmatpush1.msra.mxu0 0.0
  %118 = vmatprep.subr.mxu0 0.0
  %119 = vmatpush1.msra.mxu0 0.0
  %120 = vmatprep.subr.mxu0 0.0
  %121 = vmatpush1.msra.mxu0 0.0
  %122 = vmatprep.mubr.f32.mxu0 0.0
  %123 = vmatmul.mubr.f32.gmra.mrb[0].mxu0 %v56
  %v124 = vpop.f32.mrb[0].mxu0
  %v125 = vadd.f32 %v52, %v124
  %v126 = vpop.f32.mrb[0].mxu0
  %127 = vdwg.mxu0
  %vm128 = vcmp.gt.f32.partialorder %v125, 0.0
  %v129 = vmul.f32 %v125, 0.2
  %v130 = vsel %vm128, %v125, %v129
  %v131 = vld [vmem:[%s3] sm:$0xff]
  %v132 = vld [vmem:[%s3 + $0x8] sm:$0xff]
  %v133 = vld [vmem:[%s3 + $0x10] sm:$0xff]
  %v134 = vld [vmem:[%s3 + $0x18] sm:$0xff]
  %v135 = vld [vmem:[%s3 + $0x20] sm:$0xff]
  %v136 = vld [vmem:[%s3 + $0x28] sm:$0xff]
  %v137 = vld [vmem:[%s3 + $0x30] sm:$0xff]
  %v138 = vld [vmem:[%s3 + $0x38] sm:$0xff]
  %v139 = vld [vmem:[%s4] sm:$0x1]
  %v141 = vlaneseq
  %v142 = vshrl.u32 %v141, 7
  %v143 = vsub.s32 0, %v142
  %v144 = vrot.slane %v139, %v143
  %vm146 = vcmask 523264
  %v148 = vsel %vm146, %v130, 0
  %150 = vmatprep.subr.mxu0 0.0
  %151 = vmatpush1.msra.mxu0 %v131
  %152 = vmatprep.subr.mxu0 0.0
  %153 = vmatpush1.msra.mxu0 %v132
  %154 = vmatprep.subr.mxu0 0.0
  %155 = vmatpush1.msra.mxu0 %v133
  %156 = vmatprep.subr.mxu0 0.0
  %157 = vmatpush1.msra.mxu0 %v134
  %158 = vmatprep.subr.mxu0 0.0
  %159 = vmatpush1.msra.mxu0 %v135
  %160 = vmatprep.subr.mxu0 0.0
  %161 = vmatpush1.msra.mxu0 %v136
  %162 = vmatprep.subr.mxu0 0.0
  %163 = vmatpush1.msra.mxu0 %v137
  %164 = vmatprep.subr.mxu0 0.0
  %165 = vmatpush1.msra.mxu0 %v138
  %166 = vmatprep.subr.mxu0 0.0
  %167 = vmatpush1.msra.mxu0 0.0
  %168 = vmatprep.subr.mxu0 0.0
  %169 = vmatpush1.msra.mxu0 0.0
  %170 = vmatprep.subr.mxu0 0.0
  %171 = vmatpush1.msra.mxu0 0.0
  %172 = vmatprep.subr.mxu0 0.0
  %173 = vmatpush1.msra.mxu0 0.0
  %174 = vmatprep.subr.mxu0 0.0
  %175 = vmatpush1.msra.mxu0 0.0
  %176 = vmatprep.subr.mxu0 0.0
  %177 = vmatpush1.msra.mxu0 0.0
  %178 = vmatprep.subr.mxu0 0.0
  %179 = vmatpush1.msra.mxu0 0.0
  %180 = vmatprep.subr.mxu0 0.0
  %181 = vmatpush1.msra.mxu0 0.0
  %182 = vmatprep.subr.mxu0 0.0
  %183 = vmatpush1.msra.mxu0 0.0
  %184 = vmatprep.subr.mxu0 0.0
  %185 = vmatpush1.msra.mxu0 0.0
  %186 = vmatprep.subr.mxu0 0.0
  %187 = vmatpush1.msra.mxu0 0.0
  %188 = vmatprep.subr.mxu0 0.0
  %189 = vmatpush1.msra.mxu0 0.0
  %190 = vmatprep.subr.mxu0 0.0
  %191 = vmatpush1.msra.mxu0 0.0
  %192 = vmatprep.subr.mxu0 0.0
  %193 = vmatpush1.msra.mxu0 0.0
  %194 = vmatprep.subr.mxu0 0.0
  %195 = vmatpush1.msra.mxu0 0.0
  %196 = vmatprep.subr.mxu0 0.0
  %197 = vmatpush1.msra.mxu0 0.0
  %198 = vmatprep.subr.mxu0 0.0
  %199 = vmatpush1.msra.mxu0 0.0
  %200 = vmatprep.subr.mxu0 0.0
  %201 = vmatpush1.msra.mxu0 0.0
  %202 = vmatprep.subr.mxu0 0.0
  %203 = vmatpush1.msra.mxu0 0.0
  %204 = vmatprep.subr.mxu0 0.0
  %205 = vmatpush1.msra.mxu0 0.0
  %206 = vmatprep.subr.mxu0 0.0
  %207 = vmatpush1.msra.mxu0 0.0
  %208 = vmatprep.subr.mxu0 0.0
  %209 = vmatpush1.msra.mxu0 0.0
  %210 = vmatprep.subr.mxu0 0.0
  %211 = vmatpush1.msra.mxu0 0.0
  %212 = vmatprep.subr.mxu0 0.0
  %213 = vmatpush1.msra.mxu0 0.0
  %214 = vmatprep.mubr.f32.mxu0 0.0
  %215 = vmatmul.mubr.f32.gmra.mrb[0].mxu0 %v148
  %v216 = vpop.f32.mrb[0].mxu0
  %v217 = vadd.f32 %v144, %v216
  %v218 = vpop.f32.mrb[0].mxu0
  %219 = vdwg.mxu0
  %vm220 = vcmp.gt.f32.partialorder %v217, 0.0
  %v221 = vmul.f32 %v217, 0.2
  %v222 = vsel %vm220, %v217, %v221
  %v223 = vld [vmem:[%s5] sm:$0xff]
  %v224 = vld [vmem:[%s5 + $0x8] sm:$0xff]
  %v225 = vld [vmem:[%s5 + $0x10] sm:$0xff]
  %v226 = vld [vmem:[%s5 + $0x18] sm:$0xff]
  %v227 = vld [vmem:[%s5 + $0x20] sm:$0xff]
  %v228 = vld [vmem:[%s5 + $0x28] sm:$0xff]
  %v229 = vld [vmem:[%s5 + $0x30] sm:$0xff]
  %v230 = vld [vmem:[%s5 + $0x38] sm:$0xff]
  %v231 = vld [vmem:[%s6] sm:$0x1]
  %v233 = vlaneseq
  %v234 = vshrl.u32 %v233, 7
  %v235 = vsub.s32 0, %v234
  %v236 = vrot.slane %v231, %v235
  %v239 = vsel %vm146, %v222, 0
  %241 = vmatprep.subr.mxu0 0.0
  %242 = vmatpush1.msra.mxu0 %v223
  %243 = vmatprep.subr.mxu0 0.0
  %244 = vmatpush1.msra.mxu0 %v224
  %245 = vmatprep.subr.mxu0 0.0
  %246 = vmatpush1.msra.mxu0 %v225
  %247 = vmatprep.subr.mxu0 0.0
  %248 = vmatpush1.msra.mxu0 %v226
  %249 = vmatprep.subr.mxu0 0.0
  %250 = vmatpush1.msra.mxu0 %v227
  %251 = vmatprep.subr.mxu0 0.0
  %252 = vmatpush1.msra.mxu0 %v228
  %253 = vmatprep.subr.mxu0 0.0
  %254 = vmatpush1.msra.mxu0 %v229
  %255 = vmatprep.subr.mxu0 0.0
  %256 = vmatpush1.msra.mxu0 %v230
  %257 = vmatprep.subr.mxu0 0.0
  %258 = vmatpush1.msra.mxu0 0.0
  %259 = vmatprep.subr.mxu0 0.0
  %260 = vmatpush1.msra.mxu0 0.0
  %261 = vmatprep.subr.mxu0 0.0
  %262 = vmatpush1.msra.mxu0 0.0
  %263 = vmatprep.subr.mxu0 0.0
  %264 = vmatpush1.msra.mxu0 0.0
  %265 = vmatprep.subr.mxu0 0.0
  %266 = vmatpush1.msra.mxu0 0.0
  %267 = vmatprep.subr.mxu0 0.0
  %268 = vmatpush1.msra.mxu0 0.0
  %269 = vmatprep.subr.mxu0 0.0
  %270 = vmatpush1.msra.mxu0 0.0
  %271 = vmatprep.subr.mxu0 0.0
  %272 = vmatpush1.msra.mxu0 0.0
  %273 = vmatprep.subr.mxu0 0.0
  %274 = vmatpush1.msra.mxu0 0.0
  %275 = vmatprep.subr.mxu0 0.0
  %276 = vmatpush1.msra.mxu0 0.0
  %277 = vmatprep.subr.mxu0 0.0
  %278 = vmatpush1.msra.mxu0 0.0
  %279 = vmatprep.subr.mxu0 0.0
  %280 = vmatpush1.msra.mxu0 0.0
  %281 = vmatprep.subr.mxu0 0.0
  %282 = vmatpush1.msra.mxu0 0.0
  %283 = vmatprep.subr.mxu0 0.0
  %284 = vmatpush1.msra.mxu0 0.0
  %285 = vmatprep.subr.mxu0 0.0
  %286 = vmatpush1.msra.mxu0 0.0
  %287 = vmatprep.subr.mxu0 0.0
  %288 = vmatpush1.msra.mxu0 0.0
  %289 = vmatprep.subr.mxu0 0.0
  %290 = vmatpush1.msra.mxu0 0.0
  %291 = vmatprep.subr.mxu0 0.0
  %292 = vmatpush1.msra.mxu0 0.0
  %293 = vmatprep.subr.mxu0 0.0
  %294 = vmatpush1.msra.mxu0 0.0
  %295 = vmatprep.subr.mxu0 0.0
  %296 = vmatpush1.msra.mxu0 0.0
  %297 = vmatprep.subr.mxu0 0.0
  %298 = vmatpush1.msra.mxu0 0.0
  %299 = vmatprep.subr.mxu0 0.0
  %300 = vmatpush1.msra.mxu0 0.0
  %301 = vmatprep.subr.mxu0 0.0
  %302 = vmatpush1.msra.mxu0 0.0
  %303 = vmatprep.subr.mxu0 0.0
  %304 = vmatpush1.msra.mxu0 0.0
  %305 = vmatprep.mubr.f32.mxu0 0.0
  %306 = vmatmul.mubr.f32.gmra.mrb[0].mxu0 %v239
  %v307 = vpop.f32.mrb[0].mxu0
  %v308 = vadd.f32 %v236, %v307
  %v309 = vpop.f32.mrb[0].mxu0
  %310 = vdwg.mxu0
  %v311 = vld [vmem:[%s7] sm:$0xff]
  %v312 = vld [vmem:[%s7 + $0x8] sm:$0xff]
  %v313 = vld [vmem:[%s7 + $0x10] sm:$0xff]
  %v314 = vld [vmem:[%s7 + $0x18] sm:$0xff]
  %v315 = vld [vmem:[%s7 + $0x20] sm:$0xff]
  %v316 = vld [vmem:[%s7 + $0x28] sm:$0xff]
  %v317 = vld [vmem:[%s7 + $0x30] sm:$0xff]
  %v318 = vld [vmem:[%s7 + $0x38] sm:$0xff]
  %v319 = vld [vmem:[%s8] sm:$0xf]
  %v321 = vlaneseq
  %v322 = vshrl.u32 %v321, 7
  %v323 = vsub.s32 0, %v322
  %v324 = vrot.slane %v319, %v323
  %v325 = vlaneseq
  %v326 = vshrl.u32 %v325, 7
  %v327 = vsub.s32 1, %v326
  %v328 = vrot.slane %v319, %v327
  %v329 = vlaneseq
  %v330 = vshrl.u32 %v329, 7
  %v331 = vsub.s32 2, %v330
  %v332 = vrot.slane %v319, %v331
  %v333 = vlaneseq
  %v334 = vshrl.u32 %v333, 7
  %v335 = vsub.s32 3, %v334
  %v336 = vrot.slane %v319, %v335
  %v342 = vsel %vm54, %v308, 0
  %344 = vmatprep.subr.mxu0 %v312
  %345 = vmatpush1.msra.mxu0 %v311
  %346 = vmatprep.subr.mxu0 %v316
  %347 = vmatpush1.msra.mxu0 %v315
  %348 = vmatprep.subr.mxu0 0.0
  %349 = vmatpush1.msra.mxu0 0.0
  %350 = vmatprep.subr.mxu0 0.0
  %351 = vmatpush1.msra.mxu0 0.0
  %352 = vmatprep.subr.mxu0 0.0
  %353 = vmatpush1.msra.mxu0 0.0
  %354 = vmatprep.subr.mxu0 0.0
  %355 = vmatpush1.msra.mxu0 0.0
  %356 = vmatprep.subr.mxu0 0.0
  %357 = vmatpush1.msra.mxu0 0.0
  %358 = vmatprep.subr.mxu0 0.0
  %359 = vmatpush1.msra.mxu0 0.0
  %360 = vmatprep.subr.mxu0 0.0
  %361 = vmatpush1.msra.mxu0 0.0
  %362 = vmatprep.subr.mxu0 0.0
  %363 = vmatpush1.msra.mxu0 0.0
  %364 = vmatprep.subr.mxu0 0.0
  %365 = vmatpush1.msra.mxu0 0.0
  %366 = vmatprep.subr.mxu0 0.0
  %367 = vmatpush1.msra.mxu0 0.0
  %368 = vmatprep.subr.mxu0 0.0
  %369 = vmatpush1.msra.mxu0 0.0
  %370 = vmatprep.subr.mxu0 0.0
  %371 = vmatpush1.msra.mxu0 0.0
  %372 = vmatprep.subr.mxu0 0.0
  %373 = vmatpush1.msra.mxu0 0.0
  %374 = vmatprep.subr.mxu0 0.0
  %375 = vmatpush1.msra.mxu0 0.0
  %376 = vmatprep.subr.mxu0 0.0
  %377 = vmatpush1.msra.mxu0 0.0
  %378 = vmatprep.subr.mxu0 0.0
  %379 = vmatpush1.msra.mxu0 0.0
  %380 = vmatprep.subr.mxu0 0.0
  %381 = vmatpush1.msra.mxu0 0.0
  %382 = vmatprep.subr.mxu0 0.0
  %383 = vmatpush1.msra.mxu0 0.0
  %384 = vmatprep.subr.mxu0 0.0
  %385 = vmatpush1.msra.mxu0 0.0
  %386 = vmatprep.subr.mxu0 0.0
  %387 = vmatpush1.msra.mxu0 0.0
  %388 = vmatprep.subr.mxu0 0.0
  %389 = vmatpush1.msra.mxu0 0.0
  %390 = vmatprep.subr.mxu0 0.0
  %391 = vmatpush1.msra.mxu0 0.0
  %392 = vmatprep.subr.mxu0 0.0
  %393 = vmatpush1.msra.mxu0 0.0
  %394 = vmatprep.subr.mxu0 0.0
  %395 = vmatpush1.msra.mxu0 0.0
  %396 = vmatprep.subr.mxu0 0.0
  %397 = vmatpush1.msra.mxu0 0.0
  %398 = vmatprep.subr.mxu0 0.0
  %399 = vmatpush1.msra.mxu0 0.0
  %400 = vmatprep.subr.mxu0 0.0
  %401 = vmatpush1.msra.mxu0 0.0
  %402 = vmatprep.subr.mxu0 0.0
  %403 = vmatpush1.msra.mxu0 0.0
  %404 = vmatprep.subr.mxu0 0.0
  %405 = vmatpush1.msra.mxu0 0.0
  %406 = vmatprep.subr.mxu0 0.0
  %407 = vmatpush1.msra.mxu0 0.0
  %408 = vmatprep.mubr.f32.mxu0 0.0
  %409 = vmatmul.mubr.f32.gmra.mrb[0].mxu0 %v342
  %v410 = vpop.f32.mrb[0].mxu0
  %v411 = vadd.f32 %v324, %v410
  %v412 = vpop.f32.mrb[0].mxu0
  %v413 = vadd.f32 %v328, %v412
  %414 = vdwg.mxu0
  %415 = vmatprep.subr.mxu0 %v314
  %416 = vmatpush1.msra.mxu0 %v313
  %417 = vmatprep.subr.mxu0 %v318
  %418 = vmatpush1.msra.mxu0 %v317
  %419 = vmatprep.subr.mxu0 0.0
  %420 = vmatpush1.msra.mxu0 0.0
  %421 = vmatprep.subr.mxu0 0.0
  %422 = vmatpush1.msra.mxu0 0.0
  %423 = vmatprep.subr.mxu0 0.0
  %424 = vmatpush1.msra.mxu0 0.0
  %425 = vmatprep.subr.mxu0 0.0
  %426 = vmatpush1.msra.mxu0 0.0
  %427 = vmatprep.subr.mxu0 0.0
  %428 = vmatpush1.msra.mxu0 0.0
  %429 = vmatprep.subr.mxu0 0.0
  %430 = vmatpush1.msra.mxu0 0.0
  %431 = vmatprep.subr.mxu0 0.0
  %432 = vmatpush1.msra.mxu0 0.0
  %433 = vmatprep.subr.mxu0 0.0
  %434 = vmatpush1.msra.mxu0 0.0
  %435 = vmatprep.subr.mxu0 0.0
  %436 = vmatpush1.msra.mxu0 0.0
  %437 = vmatprep.subr.mxu0 0.0
  %438 = vmatpush1.msra.mxu0 0.0
  %439 = vmatprep.subr.mxu0 0.0
  %440 = vmatpush1.msra.mxu0 0.0
  %441 = vmatprep.subr.mxu0 0.0
  %442 = vmatpush1.msra.mxu0 0.0
  %443 = vmatprep.subr.mxu0 0.0
  %444 = vmatpush1.msra.mxu0 0.0
  %445 = vmatprep.subr.mxu0 0.0
  %446 = vmatpush1.msra.mxu0 0.0
  %447 = vmatprep.subr.mxu0 0.0
  %448 = vmatpush1.msra.mxu0 0.0
  %449 = vmatprep.subr.mxu0 0.0
  %450 = vmatpush1.msra.mxu0 0.0
  %451 = vmatprep.subr.mxu0 0.0
  %452 = vmatpush1.msra.mxu0 0.0
  %453 = vmatprep.subr.mxu0 0.0
  %454 = vmatpush1.msra.mxu0 0.0
  %455 = vmatprep.subr.mxu0 0.0
  %456 = vmatpush1.msra.mxu0 0.0
  %457 = vmatprep.subr.mxu0 0.0
  %458 = vmatpush1.msra.mxu0 0.0
  %459 = vmatprep.subr.mxu0 0.0
  %460 = vmatpush1.msra.mxu0 0.0
  %461 = vmatprep.subr.mxu0 0.0
  %462 = vmatpush1.msra.mxu0 0.0
  %463 = vmatprep.subr.mxu0 0.0
  %464 = vmatpush1.msra.mxu0 0.0
  %465 = vmatprep.subr.mxu0 0.0
  %466 = vmatpush1.msra.mxu0 0.0
  %467 = vmatprep.subr.mxu0 0.0
  %468 = vmatpush1.msra.mxu0 0.0
  %469 = vmatprep.subr.mxu0 0.0
  %470 = vmatpush1.msra.mxu0 0.0
  %471 = vmatprep.subr.mxu0 0.0
  %472 = vmatpush1.msra.mxu0 0.0
  %473 = vmatprep.subr.mxu0 0.0
  %474 = vmatpush1.msra.mxu0 0.0
  %475 = vmatprep.subr.mxu0 0.0
  %476 = vmatpush1.msra.mxu0 0.0
  %477 = vmatprep.subr.mxu0 0.0
  %478 = vmatpush1.msra.mxu0 0.0
  %479 = vmatprep.mubr.f32.mxu0 0.0
  %480 = vmatmul.mubr.f32.gmra.mrb[0].mxu0 %v342
  %v481 = vpop.f32.mrb[0].mxu0
  %v482 = vadd.f32 %v332, %v481
  %v483 = vpop.f32.mrb[0].mxu0
  %v484 = vadd.f32 %v336, %v483
  %485 = vdwg.mxu0
  %vm486 = vcmask 1041408
  %v487 = vsel %vm486, %v411, 0.0
  %v488 = vrot.slane %v487, 4
  %v489 = vadd.f32 %v487, %v488
  %v490 = vrot.slane %v489, 2
  %v491 = vadd.f32 %v489, %v490
  %v492 = vrot.slane %v491, 1
  %v493 = vadd.f32 %v491, %v492
  %v494 = vsel %vm486, %v413, 0.0
  %v495 = vrot.slane %v494, 4
  %v496 = vadd.f32 %v494, %v495
  %v497 = vrot.slane %v496, 2
  %v498 = vadd.f32 %v496, %v497
  %v499 = vrot.slane %v498, 1
  %v500 = vadd.f32 %v498, %v499
  %v501 = vsel %vm486, %v482, 0.0
  %v502 = vrot.slane %v501, 4
  %v503 = vadd.f32 %v501, %v502
  %v504 = vrot.slane %v503, 2
  %v505 = vadd.f32 %v503, %v504
  %v506 = vrot.slane %v505, 1
  %v507 = vadd.f32 %v505, %v506
  %v508 = vsel %vm486, %v484, 0.0
  %v509 = vrot.slane %v508, 4
  %v510 = vadd.f32 %v508, %v509
  %v511 = vrot.slane %v510, 2
  %v512 = vadd.f32 %v510, %v511
  %v513 = vrot.slane %v512, 1
  %v514 = vadd.f32 %v512, %v513
  %v515 = vmul.f32 %v411, %v411
  %v516 = vmul.f32 %v413, %v413
  %v517 = vmul.f32 %v482, %v482
  %v518 = vmul.f32 %v484, %v484
  %v519 = vsel %vm486, %v515, 0.0
  %v520 = vrot.slane %v519, 4
  %v521 = vadd.f32 %v519, %v520
  %v522 = vrot.slane %v521, 2
  %v523 = vadd.f32 %v521, %v522
  %v524 = vrot.slane %v523, 1
  %v525 = vadd.f32 %v523, %v524
  %v526 = vsel %vm486, %v516, 0.0
  %v527 = vrot.slane %v526, 4
  %v528 = vadd.f32 %v526, %v527
  %v529 = vrot.slane %v528, 2
  %v530 = vadd.f32 %v528, %v529
  %v531 = vrot.slane %v530, 1
  %v532 = vadd.f32 %v530, %v531
  %v533 = vsel %vm486, %v517, 0.0
  %v534 = vrot.slane %v533, 4
  %v535 = vadd.f32 %v533, %v534
  %v536 = vrot.slane %v535, 2
  %v537 = vadd.f32 %v535, %v536
  %v538 = vrot.slane %v537, 1
  %v539 = vadd.f32 %v537, %v538
  %v540 = vsel %vm486, %v518, 0.0
  %v541 = vrot.slane %v540, 4
  %v542 = vadd.f32 %v540, %v541
  %v543 = vrot.slane %v542, 2
  %v544 = vadd.f32 %v542, %v543
  %v545 = vrot.slane %v544, 1
  %v546 = vadd.f32 %v544, %v545
  %v547 = vld [vmem:[%s9] sm:$0xff]
  %v548 = vld [vmem:[%s9 + $0x8] sm:$0xff]
  %v549 = vld [vmem:[%s9 + $0x10] sm:$0xff]
  %v550 = vld [vmem:[%s9 + $0x18] sm:$0xff]
  %v551 = vld [vmem:[%s9 + $0x20] sm:$0xff]
  %v552 = vld [vmem:[%s9 + $0x28] sm:$0xff]
  %v553 = vld [vmem:[%s9 + $0x30] sm:$0xff]
  %v554 = vld [vmem:[%s9 + $0x38] sm:$0xff]
  %v555 = vld [vmem:[%s9 + $0x40] sm:$0xff]
  %v556 = vld [vmem:[%s9 + $0x48] sm:$0xff]
  %v557 = vld [vmem:[%s9 + $0x50] sm:$0xff]
  %v558 = vld [vmem:[%s9 + $0x58] sm:$0xff]
  %v559 = vld [vmem:[%s9 + $0x60] sm:$0xff]
  %v560 = vld [vmem:[%s9 + $0x68] sm:$0xff]
  %v561 = vld [vmem:[%s9 + $0x70] sm:$0xff]
  %v562 = vld [vmem:[%s9 + $0x78] sm:$0xff]
  %v563 = vld [vmem:[%s9 + $0x80] sm:$0xff]
  %v564 = vld [vmem:[%s9 + $0x88] sm:$0xff]
  %v565 = vld [vmem:[%s9 + $0x90] sm:$0xff]
  %v566 = vld [vmem:[%s9 + $0x98] sm:$0xff]
  %v567 = vld [vmem:[%s9 + $0xa0] sm:$0xff]
  %v568 = vld [vmem:[%s9 + $0xa8] sm:$0xff]
  %v569 = vld [vmem:[%s9 + $0xb0] sm:$0xff]
  %v570 = vld [vmem:[%s9 + $0xb8] sm:$0xff]
  %v571 = vld [vmem:[%s9 + $0xc0] sm:$0xff]
  %v572 = vld [vmem:[%s9 + $0xc8] sm:$0xff]
  %v573 = vld [vmem:[%s9 + $0xd0] sm:$0xff]
  %v574 = vld [vmem:[%s9 + $0xd8] sm:$0xff]
  %v575 = vld [vmem:[%s9 + $0xe0] sm:$0xff]
  %v576 = vld [vmem:[%s9 + $0xe8] sm:$0xff]
  %v577 = vld [vmem:[%s9 + $0xf0] sm:$0xff]
  %v578 = vld [vmem:[%s9 + $0xf8] sm:$0xff]
  %v579 = vld [vmem:[%s9 + $0x100] sm:$0xff]
  %v580 = vld [vmem:[%s9 + $0x108] sm:$0xff]
  %v581 = vld [vmem:[%s9 + $0x110] sm:$0xff]
  %v582 = vld [vmem:[%s9 + $0x118] sm:$0xff]
  %v583 = vld [vmem:[%s9 + $0x120] sm:$0xff]
  %v584 = vld [vmem:[%s9 + $0x128] sm:$0xff]
  %v585 = vld [vmem:[%s9 + $0x130] sm:$0xff]
  %v586 = vld [vmem:[%s9 + $0x138] sm:$0xff]
  %v587 = vld [vmem:[%s9 + $0x140] sm:$0xff]
  %v588 = vld [vmem:[%s9 + $0x148] sm:$0xff]
  %v589 = vld [vmem:[%s9 + $0x150] sm:$0xff]
  %v590 = vld [vmem:[%s9 + $0x158] sm:$0xff]
  %v591 = vld [vmem:[%s9 + $0x160] sm:$0xff]
  %v592 = vld [vmem:[%s9 + $0x168] sm:$0xff]
  %v593 = vld [vmem:[%s9 + $0x170] sm:$0xff]
  %v594 = vld [vmem:[%s9 + $0x178] sm:$0xff]
  %v595 = vld [vmem:[%s9 + $0x180] sm:$0xff]
  %v596 = vld [vmem:[%s9 + $0x188] sm:$0xff]
  %v597 = vld [vmem:[%s9 + $0x190] sm:$0xff]
  %v598 = vld [vmem:[%s9 + $0x198] sm:$0xff]
  %v599 = vld [vmem:[%s9 + $0x1a0] sm:$0xff]
  %v600 = vld [vmem:[%s9 + $0x1a8] sm:$0xff]
  %v601 = vld [vmem:[%s9 + $0x1b0] sm:$0xff]
  %v602 = vld [vmem:[%s9 + $0x1b8] sm:$0xff]
  %v603 = vld [vmem:[%s9 + $0x1c0] sm:$0xff]
  %v604 = vld [vmem:[%s9 + $0x1c8] sm:$0xff]
  %v605 = vld [vmem:[%s9 + $0x1d0] sm:$0xff]
  %v606 = vld [vmem:[%s9 + $0x1d8] sm:$0xff]
  %v607 = vld [vmem:[%s9 + $0x1e0] sm:$0xff]
  %v608 = vld [vmem:[%s9 + $0x1e8] sm:$0xff]
  %v609 = vld [vmem:[%s9 + $0x1f0] sm:$0xff]
  %v610 = vld [vmem:[%s9 + $0x1f8] sm:$0xff]
  %611 = vmatprep.subr.mxu0 0.0
  %612 = vmatpush1.msra.mxu0 %v547
  %613 = vmatprep.subr.mxu0 0.0
  %614 = vmatpush1.msra.mxu0 %v548
  %615 = vmatprep.subr.mxu0 0.0
  %616 = vmatpush1.msra.mxu0 %v549
  %617 = vmatprep.subr.mxu0 0.0
  %618 = vmatpush1.msra.mxu0 %v550
  %619 = vmatprep.subr.mxu0 0.0
  %620 = vmatpush1.msra.mxu0 %v551
  %621 = vmatprep.subr.mxu0 0.0
  %622 = vmatpush1.msra.mxu0 %v552
  %623 = vmatprep.subr.mxu0 0.0
  %624 = vmatpush1.msra.mxu0 %v553
  %625 = vmatprep.subr.mxu0 0.0
  %626 = vmatpush1.msra.mxu0 %v554
  %627 = vmatprep.subr.mxu0 0.0
  %628 = vmatpush1.msra.mxu0 %v555
  %629 = vmatprep.subr.mxu0 0.0
  %630 = vmatpush1.msra.mxu0 %v556
  %631 = vmatprep.subr.mxu0 0.0
  %632 = vmatpush1.msra.mxu0 %v557
  %633 = vmatprep.subr.mxu0 0.0
  %634 = vmatpush1.msra.mxu0 %v558
  %635 = vmatprep.subr.mxu0 0.0
  %636 = vmatpush1.msra.mxu0 %v559
  %637 = vmatprep.subr.mxu0 0.0
  %638 = vmatpush1.msra.mxu0 %v560
  %639 = vmatprep.subr.mxu0 0.0
  %640 = vmatpush1.msra.mxu0 %v561
  %641 = vmatprep.subr.mxu0 0.0
  %642 = vmatpush1.msra.mxu0 %v562
  %643 = vmatprep.subr.mxu0 0.0
  %644 = vmatpush1.msra.mxu0 %v563
  %645 = vmatprep.subr.mxu0 0.0
  %646 = vmatpush1.msra.mxu0 %v564
  %647 = vmatprep.subr.mxu0 0.0
  %648 = vmatpush1.msra.mxu0 %v565
  %649 = vmatprep.subr.mxu0 0.0
  %650 = vmatpush1.msra.mxu0 %v566
  %651 = vmatprep.subr.mxu0 0.0
  %652 = vmatpush1.msra.mxu0 %v567
  %653 = vmatprep.subr.mxu0 0.0
  %654 = vmatpush1.msra.mxu0 %v568
  %655 = vmatprep.subr.mxu0 0.0
  %656 = vmatpush1.msra.mxu0 %v569
  %657 = vmatprep.subr.mxu0 0.0
  %658 = vmatpush1.msra.mxu0 %v570
  %659 = vmatprep.subr.mxu0 0.0
  %660 = vmatpush1.msra.mxu0 %v571
  %661 = vmatprep.subr.mxu0 0.0
  %662 = vmatpush1.msra.mxu0 %v572
  %663 = vmatprep.subr.mxu0 0.0
  %664 = vmatpush1.msra.mxu0 %v573
  %665 = vmatprep.subr.mxu0 0.0
  %666 = vmatpush1.msra.mxu0 %v574
  %667 = vmatprep.subr.mxu0 0.0
  %668 = vmatpush1.msra.mxu0 %v575
  %669 = vmatprep.subr.mxu0 0.0
  %670 = vmatpush1.msra.mxu0 %v576
  %671 = vmatprep.subr.mxu0 0.0
  %672 = vmatpush1.msra.mxu0 %v577
  %673 = vmatprep.subr.mxu0 0.0
  %674 = vmatpush1.msra.mxu0 %v578
  %675 = vmatprep.mubr.f32.mxu0 %v500
  %676 = vmatmul.mubr.f32.gmra.mrb[0].mxu0 %v493
  %v677 = vpop.f32.mrb[0].mxu0
  %v678 = vadd.f32 0.0, %v677
  %v679 = vpop.f32.mrb[0].mxu0
  %680 = vdwg.mxu0
  %681 = vmatprep.subr.mxu0 0.0
  %682 = vmatpush1.msra.mxu0 %v579
  %683 = vmatprep.subr.mxu0 0.0
  %684 = vmatpush1.msra.mxu0 %v580
  %685 = vmatprep.subr.mxu0 0.0
  %686 = vmatpush1.msra.mxu0 %v581
  %687 = vmatprep.subr.mxu0 0.0
  %688 = vmatpush1.msra.mxu0 %v582
  %689 = vmatprep.subr.mxu0 0.0
  %690 = vmatpush1.msra.mxu0 %v583
  %691 = vmatprep.subr.mxu0 0.0
  %692 = vmatpush1.msra.mxu0 %v584
  %693 = vmatprep.subr.mxu0 0.0
  %694 = vmatpush1.msra.mxu0 %v585
  %695 = vmatprep.subr.mxu0 0.0
  %696 = vmatpush1.msra.mxu0 %v586
  %697 = vmatprep.subr.mxu0 0.0
  %698 = vmatpush1.msra.mxu0 %v587
  %699 = vmatprep.subr.mxu0 0.0
  %700 = vmatpush1.msra.mxu0 %v588
  %701 = vmatprep.subr.mxu0 0.0
  %702 = vmatpush1.msra.mxu0 %v589
  %703 = vmatprep.subr.mxu0 0.0
  %704 = vmatpush1.msra.mxu0 %v590
  %705 = vmatprep.subr.mxu0 0.0
  %706 = vmatpush1.msra.mxu0 %v591
  %707 = vmatprep.subr.mxu0 0.0
  %708 = vmatpush1.msra.mxu0 %v592
  %709 = vmatprep.subr.mxu0 0.0
  %710 = vmatpush1.msra.mxu0 %v593
  %711 = vmatprep.subr.mxu0 0.0
  %712 = vmatpush1.msra.mxu0 %v594
  %713 = vmatprep.subr.mxu0 0.0
  %714 = vmatpush1.msra.mxu0 %v595
  %715 = vmatprep.subr.mxu0 0.0
  %716 = vmatpush1.msra.mxu0 %v596
  %717 = vmatprep.subr.mxu0 0.0
  %718 = vmatpush1.msra.mxu0 %v597
  %719 = vmatprep.subr.mxu0 0.0
  %720 = vmatpush1.msra.mxu0 %v598
  %721 = vmatprep.subr.mxu0 0.0
  %722 = vmatpush1.msra.mxu0 %v599
  %723 = vmatprep.subr.mxu0 0.0
  %724 = vmatpush1.msra.mxu0 %v600
  %725 = vmatprep.subr.mxu0 0.0
  %726 = vmatpush1.msra.mxu0 %v601
  %727 = vmatprep.subr.mxu0 0.0
  %728 = vmatpush1.msra.mxu0 %v602
  %729 = vmatprep.subr.mxu0 0.0
  %730 = vmatpush1.msra.mxu0 %v603
  %731 = vmatprep.subr.mxu0 0.0
  %732 = vmatpush1.msra.mxu0 %v604
  %733 = vmatprep.subr.mxu0 0.0
  %734 = vmatpush1.msra.mxu0 %v605
  %735 = vmatprep.subr.mxu0 0.0
  %736 = vmatpush1.msra.mxu0 %v606
  %737 = vmatprep.subr.mxu0 0.0
  %738 = vmatpush1.msra.mxu0 %v607
  %739 = vmatprep.subr.mxu0 0.0
  %740 = vmatpush1.msra.mxu0 %v608
  %741 = vmatprep.subr.mxu0 0.0
  %742 = vmatpush1.msra.mxu0 %v609
  %743 = vmatprep.subr.mxu0 0.0
  %744 = vmatpush1.msra.mxu0 %v610
  %745 = vmatprep.mubr.f32.mxu0 %v514
  %746 = vmatmul.mubr.f32.gmra.mrb[0].mxu0 %v507
  %v747 = vpop.f32.mrb[0].mxu0
  %v748 = vadd.f32 %v678, %v747
  %v749 = vpop.f32.mrb[0].mxu0
  %750 = vdwg.mxu0
  %751 = vmatprep.subr.mxu0 0.0
  %752 = vmatpush1.msra.mxu0 %v547
  %753 = vmatprep.subr.mxu0 0.0
  %754 = vmatpush1.msra.mxu0 %v548
  %755 = vmatprep.subr.mxu0 0.0
  %756 = vmatpush1.msra.mxu0 %v549
  %757 = vmatprep.subr.mxu0 0.0
  %758 = vmatpush1.msra.mxu0 %v550
  %759 = vmatprep.subr.mxu0 0.0
  %760 = vmatpush1.msra.mxu0 %v551
  %761 = vmatprep.subr.mxu0 0.0
  %762 = vmatpush1.msra.mxu0 %v552
  %763 = vmatprep.subr.mxu0 0.0
  %764 = vmatpush1.msra.mxu0 %v553
  %765 = vmatprep.subr.mxu0 0.0
  %766 = vmatpush1.msra.mxu0 %v554
  %767 = vmatprep.subr.mxu0 0.0
  %768 = vmatpush1.msra.mxu0 %v555
  %769 = vmatprep.subr.mxu0 0.0
  %770 = vmatpush1.msra.mxu0 %v556
  %771 = vmatprep.subr.mxu0 0.0
  %772 = vmatpush1.msra.mxu0 %v557
  %773 = vmatprep.subr.mxu0 0.0
  %774 = vmatpush1.msra.mxu0 %v558
  %775 = vmatprep.subr.mxu0 0.0
  %776 = vmatpush1.msra.mxu0 %v559
  %777 = vmatprep.subr.mxu0 0.0
  %778 = vmatpush1.msra.mxu0 %v560
  %779 = vmatprep.subr.mxu0 0.0
  %780 = vmatpush1.msra.mxu0 %v561
  %781 = vmatprep.subr.mxu0 0.0
  %782 = vmatpush1.msra.mxu0 %v562
  %783 = vmatprep.subr.mxu0 0.0
  %784 = vmatpush1.msra.mxu0 %v563
  %785 = vmatprep.subr.mxu0 0.0
  %786 = vmatpush1.msra.mxu0 %v564
  %787 = vmatprep.subr.mxu0 0.0
  %788 = vmatpush1.msra.mxu0 %v565
  %789 = vmatprep.subr.mxu0 0.0
  %790 = vmatpush1.msra.mxu0 %v566
  %791 = vmatprep.subr.mxu0 0.0
  %792 = vmatpush1.msra.mxu0 %v567
  %793 = vmatprep.subr.mxu0 0.0
  %794 = vmatpush1.msra.mxu0 %v568
  %795 = vmatprep.subr.mxu0 0.0
  %796 = vmatpush1.msra.mxu0 %v569
  %797 = vmatprep.subr.mxu0 0.0
  %798 = vmatpush1.msra.mxu0 %v570
  %799 = vmatprep.subr.mxu0 0.0
  %800 = vmatpush1.msra.mxu0 %v571
  %801 = vmatprep.subr.mxu0 0.0
  %802 = vmatpush1.msra.mxu0 %v572
  %803 = vmatprep.subr.mxu0 0.0
  %804 = vmatpush1.msra.mxu0 %v573
  %805 = vmatprep.subr.mxu0 0.0
  %806 = vmatpush1.msra.mxu0 %v574
  %807 = vmatprep.subr.mxu0 0.0
  %808 = vmatpush1.msra.mxu0 %v575
  %809 = vmatprep.subr.mxu0 0.0
  %810 = vmatpush1.msra.mxu0 %v576
  %811 = vmatprep.subr.mxu0 0.0
  %812 = vmatpush1.msra.mxu0 %v577
  %813 = vmatprep.subr.mxu0 0.0
  %814 = vmatpush1.msra.mxu0 %v578
  %815 = vmatprep.mubr.f32.mxu0 %v532
  %816 = vmatmul.mubr.f32.gmra.mrb[0].mxu0 %v525
  %v817 = vpop.f32.mrb[0].mxu0
  %v818 = vadd.f32 0.0, %v817
  %v819 = vpop.f32.mrb[0].mxu0
  %820 = vdwg.mxu0
  %821 = vmatprep.subr.mxu0 0.0
  %822 = vmatpush1.msra.mxu0 %v579
  %823 = vmatprep.subr.mxu0 0.0
  %824 = vmatpush1.msra.mxu0 %v580
  %825 = vmatprep.subr.mxu0 0.0
  %826 = vmatpush1.msra.mxu0 %v581
  %827 = vmatprep.subr.mxu0 0.0
  %828 = vmatpush1.msra.mxu0 %v582
  %829 = vmatprep.subr.mxu0 0.0
  %830 = vmatpush1.msra.mxu0 %v583
  %831 = vmatprep.subr.mxu0 0.0
  %832 = vmatpush1.msra.mxu0 %v584
  %833 = vmatprep.subr.mxu0 0.0
  %834 = vmatpush1.msra.mxu0 %v585
  %835 = vmatprep.subr.mxu0 0.0
  %836 = vmatpush1.msra.mxu0 %v586
  %837 = vmatprep.subr.mxu0 0.0
  %838 = vmatpush1.msra.mxu0 %v587
  %839 = vmatprep.subr.mxu0 0.0
  %840 = vmatpush1.msra.mxu0 %v588
  %841 = vmatprep.subr.mxu0 0.0
  %842 = vmatpush1.msra.mxu0 %v589
  %843 = vmatprep.subr.mxu0 0.0
  %844 = vmatpush1.msra.mxu0 %v590
  %845 = vmatprep.subr.mxu0 0.0
  %846 = vmatpush1.msra.mxu0 %v591
  %847 = vmatprep.subr.mxu0 0.0
  %848 = vmatpush1.msra.mxu0 %v592
  %849 = vmatprep.subr.mxu0 0.0
  %850 = vmatpush1.msra.mxu0 %v593
  %851 = vmatprep.subr.mxu0 0.0
  %852 = vmatpush1.msra.mxu0 %v594
  %853 = vmatprep.subr.mxu0 0.0
  %854 = vmatpush1.msra.mxu0 %v595
  %855 = vmatprep.subr.mxu0 0.0
  %856 = vmatpush1.msra.mxu0 %v596
  %857 = vmatprep.subr.mxu0 0.0
  %858 = vmatpush1.msra.mxu0 %v597
  %859 = vmatprep.subr.mxu0 0.0
  %860 = vmatpush1.msra.mxu0 %v598
  %861 = vmatprep.subr.mxu0 0.0
  %862 = vmatpush1.msra.mxu0 %v599
  %863 = vmatprep.subr.mxu0 0.0
  %864 = vmatpush1.msra.mxu0 %v600
  %865 = vmatprep.subr.mxu0 0.0
  %866 = vmatpush1.msra.mxu0 %v601
  %867 = vmatprep.subr.mxu0 0.0
  %868 = vmatpush1.msra.mxu0 %v602
  %869 = vmatprep.subr.mxu0 0.0
  %870 = vmatpush1.msra.mxu0 %v603
  %871 = vmatprep.subr.mxu0 0.0
  %872 = vmatpush1.msra.mxu0 %v604
  %873 = vmatprep.subr.mxu0 0.0
  %874 = vmatpush1.msra.mxu0 %v605
  %875 = vmatprep.subr.mxu0 0.0
  %876 = vmatpush1.msra.mxu0 %v606
  %877 = vmatprep.subr.mxu0 0.0
  %878 = vmatpush1.msra.mxu0 %v607
  %879 = vmatprep.subr.mxu0 0.0
  %880 = vmatpush1.msra.mxu0 %v608
  %881 = vmatprep.subr.mxu0 0.0
  %882 = vmatpush1.msra.mxu0 %v609
  %883 = vmatprep.subr.mxu0 0.0
  %884 = vmatpush1.msra.mxu0 %v610
  %885 = vmatprep.mubr.f32.mxu0 %v546
  %886 = vmatmul.mubr.f32.gmra.mrb[0].mxu0 %v539
  %v887 = vpop.f32.mrb[0].mxu0
  %v888 = vadd.f32 %v818, %v887
  %v889 = vpop.f32.mrb[0].mxu0
  %890 = vdwg.mxu0
  %v891 = vmul.f32 %v748, 0.03125
  %v892 = vmul.f32 %v888, 0.03125
  %v893 = vmul.f32 %v891, %v891
  %v894 = vsub.f32 %v892, %v893
  %v895 = vmax.f32 %v894, 0.0
  %v896 = vld [vmem:[%s11] sm:$0x1]
  %v897 = vadd.f32 %v895, 1e-05
  %v898 = vrsqrt.pop %v897
  %v899 = vmul.f32 %v896, %v898
  %v900 = vld [vmem:[%s12] sm:$0x1]
  %v901 = vmul.f32 %v891, %v899
  %v902 = vsub.f32 %v900, %v901
  %v903 = vld [vmem:[%s10] sm:$0xff]
  %v904 = vld [vmem:[%s10 + $0x8] sm:$0xff]
  %v905 = vld [vmem:[%s10 + $0x10] sm:$0xff]
  %v906 = vld [vmem:[%s10 + $0x18] sm:$0xff]
  %v907 = vld [vmem:[%s10 + $0x20] sm:$0xff]
  %v908 = vld [vmem:[%s10 + $0x28] sm:$0xff]
  %v909 = vld [vmem:[%s10 + $0x30] sm:$0xff]
  %v910 = vld [vmem:[%s10 + $0x38] sm:$0xff]
  %v911 = vld [vmem:[%s10 + $0x40] sm:$0xff]
  %v912 = vld [vmem:[%s10 + $0x48] sm:$0xff]
  %v913 = vld [vmem:[%s10 + $0x50] sm:$0xff]
  %v914 = vld [vmem:[%s10 + $0x58] sm:$0xff]
  %v915 = vld [vmem:[%s10 + $0x60] sm:$0xff]
  %v916 = vld [vmem:[%s10 + $0x68] sm:$0xff]
  %v917 = vld [vmem:[%s10 + $0x70] sm:$0xff]
  %v918 = vld [vmem:[%s10 + $0x78] sm:$0xff]
  %vm919 = vcmask 261120
  %v921 = vsel %vm919, %v899, 0
  %923 = vmatprep.subr.mxu0 %v904
  %924 = vmatpush1.msra.mxu0 %v903
  %925 = vmatprep.subr.mxu0 %v908
  %926 = vmatpush1.msra.mxu0 %v907
  %927 = vmatprep.subr.mxu0 %v912
  %928 = vmatpush1.msra.mxu0 %v911
  %929 = vmatprep.subr.mxu0 %v916
  %930 = vmatpush1.msra.mxu0 %v915
  %931 = vmatprep.subr.mxu0 0.0
  %932 = vmatpush1.msra.mxu0 0.0
  %933 = vmatprep.subr.mxu0 0.0
  %934 = vmatpush1.msra.mxu0 0.0
  %935 = vmatprep.subr.mxu0 0.0
  %936 = vmatpush1.msra.mxu0 0.0
  %937 = vmatprep.subr.mxu0 0.0
  %938 = vmatpush1.msra.mxu0 0.0
  %939 = vmatprep.subr.mxu0 0.0
  %940 = vmatpush1.msra.mxu0 0.0
  %941 = vmatprep.subr.mxu0 0.0
  %942 = vmatpush1.msra.mxu0 0.0
  %943 = vmatprep.subr.mxu0 0.0
  %944 = vmatpush1.msra.mxu0 0.0
  %945 = vmatprep.subr.mxu0 0.0
  %946 = vmatpush1.msra.mxu0 0.0
  %947 = vmatprep.subr.mxu0 0.0
  %948 = vmatpush1.msra.mxu0 0.0
  %949 = vmatprep.subr.mxu0 0.0
  %950 = vmatpush1.msra.mxu0 0.0
  %951 = vmatprep.subr.mxu0 0.0
  %952 = vmatpush1.msra.mxu0 0.0
  %953 = vmatprep.subr.mxu0 0.0
  %954 = vmatpush1.msra.mxu0 0.0
  %955 = vmatprep.subr.mxu0 0.0
  %956 = vmatpush1.msra.mxu0 0.0
  %957 = vmatprep.subr.mxu0 0.0
  %958 = vmatpush1.msra.mxu0 0.0
  %959 = vmatprep.subr.mxu0 0.0
  %960 = vmatpush1.msra.mxu0 0.0
  %961 = vmatprep.subr.mxu0 0.0
  %962 = vmatpush1.msra.mxu0 0.0
  %963 = vmatprep.subr.mxu0 0.0
  %964 = vmatpush1.msra.mxu0 0.0
  %965 = vmatprep.subr.mxu0 0.0
  %966 = vmatpush1.msra.mxu0 0.0
  %967 = vmatprep.subr.mxu0 0.0
  %968 = vmatpush1.msra.mxu0 0.0
  %969 = vmatprep.subr.mxu0 0.0
  %970 = vmatpush1.msra.mxu0 0.0
  %971 = vmatprep.subr.mxu0 0.0
  %972 = vmatpush1.msra.mxu0 0.0
  %973 = vmatprep.subr.mxu0 0.0
  %974 = vmatpush1.msra.mxu0 0.0
  %975 = vmatprep.subr.mxu0 0.0
  %976 = vmatpush1.msra.mxu0 0.0
  %977 = vmatprep.subr.mxu0 0.0
  %978 = vmatpush1.msra.mxu0 0.0
  %979 = vmatprep.subr.mxu0 0.0
  %980 = vmatpush1.msra.mxu0 0.0
  %981 = vmatprep.subr.mxu0 0.0
  %982 = vmatpush1.msra.mxu0 0.0
  %983 = vmatprep.subr.mxu0 0.0
  %984 = vmatpush1.msra.mxu0 0.0
  %985 = vmatprep.subr.mxu0 0.0
  %986 = vmatpush1.msra.mxu0 0.0
  %987 = vmatprep.mubr.f32.mxu0 0.0
  %988 = vmatmul.mubr.f32.gmra.mrb[0].mxu0 %v921
  %v989 = vpop.f32.mrb[0].mxu0
  %v990 = vadd.f32 0.0, %v989
  %v991 = vpop.f32.mrb[0].mxu0
  %v992 = vadd.f32 0.0, %v991
  %993 = vdwg.mxu0
  %994 = vmatprep.subr.mxu0 %v906
  %995 = vmatpush1.msra.mxu0 %v905
  %996 = vmatprep.subr.mxu0 %v910
  %997 = vmatpush1.msra.mxu0 %v909
  %998 = vmatprep.subr.mxu0 %v914
  %999 = vmatpush1.msra.mxu0 %v913
  %1000 = vmatprep.subr.mxu0 %v918
  %1001 = vmatpush1.msra.mxu0 %v917
  %1002 = vmatprep.subr.mxu0 0.0
  %1003 = vmatpush1.msra.mxu0 0.0
  %1004 = vmatprep.subr.mxu0 0.0
  %1005 = vmatpush1.msra.mxu0 0.0
  %1006 = vmatprep.subr.mxu0 0.0
  %1007 = vmatpush1.msra.mxu0 0.0
  %1008 = vmatprep.subr.mxu0 0.0
  %1009 = vmatpush1.msra.mxu0 0.0
  %1010 = vmatprep.subr.mxu0 0.0
  %1011 = vmatpush1.msra.mxu0 0.0
  %1012 = vmatprep.subr.mxu0 0.0
  %1013 = vmatpush1.msra.mxu0 0.0
  %1014 = vmatprep.subr.mxu0 0.0
  %1015 = vmatpush1.msra.mxu0 0.0
  %1016 = vmatprep.subr.mxu0 0.0
  %1017 = vmatpush1.msra.mxu0 0.0
  %1018 = vmatprep.subr.mxu0 0.0
  %1019 = vmatpush1.msra.mxu0 0.0
  %1020 = vmatprep.subr.mxu0 0.0
  %1021 = vmatpush1.msra.mxu0 0.0
  %1022 = vmatprep.subr.mxu0 0.0
  %1023 = vmatpush1.msra.mxu0 0.0
  %1024 = vmatprep.subr.mxu0 0.0
  %1025 = vmatpush1.msra.mxu0 0.0
  %1026 = vmatprep.subr.mxu0 0.0
  %1027 = vmatpush1.msra.mxu0 0.0
  %1028 = vmatprep.subr.mxu0 0.0
  %1029 = vmatpush1.msra.mxu0 0.0
  %1030 = vmatprep.subr.mxu0 0.0
  %1031 = vmatpush1.msra.mxu0 0.0
  %1032 = vmatprep.subr.mxu0 0.0
  %1033 = vmatpush1.msra.mxu0 0.0
  %1034 = vmatprep.subr.mxu0 0.0
  %1035 = vmatpush1.msra.mxu0 0.0
  %1036 = vmatprep.subr.mxu0 0.0
  %1037 = vmatpush1.msra.mxu0 0.0
  %1038 = vmatprep.subr.mxu0 0.0
  %1039 = vmatpush1.msra.mxu0 0.0
  %1040 = vmatprep.subr.mxu0 0.0
  %1041 = vmatpush1.msra.mxu0 0.0
  %1042 = vmatprep.subr.mxu0 0.0
  %1043 = vmatpush1.msra.mxu0 0.0
  %1044 = vmatprep.subr.mxu0 0.0
  %1045 = vmatpush1.msra.mxu0 0.0
  %1046 = vmatprep.subr.mxu0 0.0
  %1047 = vmatpush1.msra.mxu0 0.0
  %1048 = vmatprep.subr.mxu0 0.0
  %1049 = vmatpush1.msra.mxu0 0.0
  %1050 = vmatprep.subr.mxu0 0.0
  %1051 = vmatpush1.msra.mxu0 0.0
  %1052 = vmatprep.subr.mxu0 0.0
  %1053 = vmatpush1.msra.mxu0 0.0
  %1054 = vmatprep.subr.mxu0 0.0
  %1055 = vmatpush1.msra.mxu0 0.0
  %1056 = vmatprep.subr.mxu0 0.0
  %1057 = vmatpush1.msra.mxu0 0.0
  %1058 = vmatprep.mubr.f32.mxu0 0.0
  %1059 = vmatmul.mubr.f32.gmra.mrb[0].mxu0 %v921
  %v1060 = vpop.f32.mrb[0].mxu0
  %v1061 = vadd.f32 0.0, %v1060
  %v1062 = vpop.f32.mrb[0].mxu0
  %v1063 = vadd.f32 0.0, %v1062
  %1064 = vdwg.mxu0
  %v1066 = vsel %vm919, %v902, 0
  %1068 = vmatprep.subr.mxu0 %v904
  %1069 = vmatpush1.msra.mxu0 %v903
  %1070 = vmatprep.subr.mxu0 %v908
  %1071 = vmatpush1.msra.mxu0 %v907
  %1072 = vmatprep.subr.mxu0 %v912
  %1073 = vmatpush1.msra.mxu0 %v911
  %1074 = vmatprep.subr.mxu0 %v916
  %1075 = vmatpush1.msra.mxu0 %v915
  %1076 = vmatprep.subr.mxu0 0.0
  %1077 = vmatpush1.msra.mxu0 0.0
  %1078 = vmatprep.subr.mxu0 0.0
  %1079 = vmatpush1.msra.mxu0 0.0
  %1080 = vmatprep.subr.mxu0 0.0
  %1081 = vmatpush1.msra.mxu0 0.0
  %1082 = vmatprep.subr.mxu0 0.0
  %1083 = vmatpush1.msra.mxu0 0.0
  %1084 = vmatprep.subr.mxu0 0.0
  %1085 = vmatpush1.msra.mxu0 0.0
  %1086 = vmatprep.subr.mxu0 0.0
  %1087 = vmatpush1.msra.mxu0 0.0
  %1088 = vmatprep.subr.mxu0 0.0
  %1089 = vmatpush1.msra.mxu0 0.0
  %1090 = vmatprep.subr.mxu0 0.0
  %1091 = vmatpush1.msra.mxu0 0.0
  %1092 = vmatprep.subr.mxu0 0.0
  %1093 = vmatpush1.msra.mxu0 0.0
  %1094 = vmatprep.subr.mxu0 0.0
  %1095 = vmatpush1.msra.mxu0 0.0
  %1096 = vmatprep.subr.mxu0 0.0
  %1097 = vmatpush1.msra.mxu0 0.0
  %1098 = vmatprep.subr.mxu0 0.0
  %1099 = vmatpush1.msra.mxu0 0.0
  %1100 = vmatprep.subr.mxu0 0.0
  %1101 = vmatpush1.msra.mxu0 0.0
  %1102 = vmatprep.subr.mxu0 0.0
  %1103 = vmatpush1.msra.mxu0 0.0
  %1104 = vmatprep.subr.mxu0 0.0
  %1105 = vmatpush1.msra.mxu0 0.0
  %1106 = vmatprep.subr.mxu0 0.0
  %1107 = vmatpush1.msra.mxu0 0.0
  %1108 = vmatprep.subr.mxu0 0.0
  %1109 = vmatpush1.msra.mxu0 0.0
  %1110 = vmatprep.subr.mxu0 0.0
  %1111 = vmatpush1.msra.mxu0 0.0
  %1112 = vmatprep.subr.mxu0 0.0
  %1113 = vmatpush1.msra.mxu0 0.0
  %1114 = vmatprep.subr.mxu0 0.0
  %1115 = vmatpush1.msra.mxu0 0.0
  %1116 = vmatprep.subr.mxu0 0.0
  %1117 = vmatpush1.msra.mxu0 0.0
  %1118 = vmatprep.subr.mxu0 0.0
  %1119 = vmatpush1.msra.mxu0 0.0
  %1120 = vmatprep.subr.mxu0 0.0
  %1121 = vmatpush1.msra.mxu0 0.0
  %1122 = vmatprep.subr.mxu0 0.0
  %1123 = vmatpush1.msra.mxu0 0.0
  %1124 = vmatprep.subr.mxu0 0.0
  %1125 = vmatpush1.msra.mxu0 0.0
  %1126 = vmatprep.subr.mxu0 0.0
  %1127 = vmatpush1.msra.mxu0 0.0
  %1128 = vmatprep.subr.mxu0 0.0
  %1129 = vmatpush1.msra.mxu0 0.0
  %1130 = vmatprep.subr.mxu0 0.0
  %1131 = vmatpush1.msra.mxu0 0.0
  %1132 = vmatprep.mubr.f32.mxu0 0.0
  %1133 = vmatmul.mubr.f32.gmra.mrb[0].mxu0 %v1066
  %v1134 = vpop.f32.mrb[0].mxu0
  %v1135 = vadd.f32 0.0, %v1134
  %v1136 = vpop.f32.mrb[0].mxu0
  %v1137 = vadd.f32 0.0, %v1136
  %1138 = vdwg.mxu0
  %1139 = vmatprep.subr.mxu0 %v906
  %1140 = vmatpush1.msra.mxu0 %v905
  %1141 = vmatprep.subr.mxu0 %v910
  %1142 = vmatpush1.msra.mxu0 %v909
  %1143 = vmatprep.subr.mxu0 %v914
  %1144 = vmatpush1.msra.mxu0 %v913
  %1145 = vmatprep.subr.mxu0 %v918
  %1146 = vmatpush1.msra.mxu0 %v917
  %1147 = vmatprep.subr.mxu0 0.0
  %1148 = vmatpush1.msra.mxu0 0.0
  %1149 = vmatprep.subr.mxu0 0.0
  %1150 = vmatpush1.msra.mxu0 0.0
  %1151 = vmatprep.subr.mxu0 0.0
  %1152 = vmatpush1.msra.mxu0 0.0
  %1153 = vmatprep.subr.mxu0 0.0
  %1154 = vmatpush1.msra.mxu0 0.0
  %1155 = vmatprep.subr.mxu0 0.0
  %1156 = vmatpush1.msra.mxu0 0.0
  %1157 = vmatprep.subr.mxu0 0.0
  %1158 = vmatpush1.msra.mxu0 0.0
  %1159 = vmatprep.subr.mxu0 0.0
  %1160 = vmatpush1.msra.mxu0 0.0
  %1161 = vmatprep.subr.mxu0 0.0
  %1162 = vmatpush1.msra.mxu0 0.0
  %1163 = vmatprep.subr.mxu0 0.0
  %1164 = vmatpush1.msra.mxu0 0.0
  %1165 = vmatprep.subr.mxu0 0.0
  %1166 = vmatpush1.msra.mxu0 0.0
  %1167 = vmatprep.subr.mxu0 0.0
  %1168 = vmatpush1.msra.mxu0 0.0
  %1169 = vmatprep.subr.mxu0 0.0
  %1170 = vmatpush1.msra.mxu0 0.0
  %1171 = vmatprep.subr.mxu0 0.0
  %1172 = vmatpush1.msra.mxu0 0.0
  %1173 = vmatprep.subr.mxu0 0.0
  %1174 = vmatpush1.msra.mxu0 0.0
  %1175 = vmatprep.subr.mxu0 0.0
  %1176 = vmatpush1.msra.mxu0 0.0
  %1177 = vmatprep.subr.mxu0 0.0
  %1178 = vmatpush1.msra.mxu0 0.0
  %1179 = vmatprep.subr.mxu0 0.0
  %1180 = vmatpush1.msra.mxu0 0.0
  %1181 = vmatprep.subr.mxu0 0.0
  %1182 = vmatpush1.msra.mxu0 0.0
  %1183 = vmatprep.subr.mxu0 0.0
  %1184 = vmatpush1.msra.mxu0 0.0
  %1185 = vmatprep.subr.mxu0 0.0
  %1186 = vmatpush1.msra.mxu0 0.0
  %1187 = vmatprep.subr.mxu0 0.0
  %1188 = vmatpush1.msra.mxu0 0.0
  %1189 = vmatprep.subr.mxu0 0.0
  %1190 = vmatpush1.msra.mxu0 0.0
  %1191 = vmatprep.subr.mxu0 0.0
  %1192 = vmatpush1.msra.mxu0 0.0
  %1193 = vmatprep.subr.mxu0 0.0
  %1194 = vmatpush1.msra.mxu0 0.0
  %1195 = vmatprep.subr.mxu0 0.0
  %1196 = vmatpush1.msra.mxu0 0.0
  %1197 = vmatprep.subr.mxu0 0.0
  %1198 = vmatpush1.msra.mxu0 0.0
  %1199 = vmatprep.subr.mxu0 0.0
  %1200 = vmatpush1.msra.mxu0 0.0
  %1201 = vmatprep.subr.mxu0 0.0
  %1202 = vmatpush1.msra.mxu0 0.0
  %1203 = vmatprep.mubr.f32.mxu0 0.0
  %1204 = vmatmul.mubr.f32.gmra.mrb[0].mxu0 %v1066
  %v1205 = vpop.f32.mrb[0].mxu0
  %v1206 = vadd.f32 0.0, %v1205
  %v1207 = vpop.f32.mrb[0].mxu0
  %v1208 = vadd.f32 0.0, %v1207
  %1209 = vdwg.mxu0
  %v1210 = vlaneseq
  %v1211 = vshrl.u32 %v1210, 7
  %v1212 = vsub.s32 0, %v1211
  %v1213 = vrot.slane %v990, %v1212
  %v1214 = vlaneseq
  %v1215 = vshrl.u32 %v1214, 7
  %v1216 = vsub.s32 0, %v1215
  %v1217 = vrot.slane %v992, %v1216
  %v1218 = vlaneseq
  %v1219 = vshrl.u32 %v1218, 7
  %v1220 = vsub.s32 0, %v1219
  %v1221 = vrot.slane %v1061, %v1220
  %v1222 = vlaneseq
  %v1223 = vshrl.u32 %v1222, 7
  %v1224 = vsub.s32 0, %v1223
  %v1225 = vrot.slane %v1063, %v1224
  %v1226 = vmul.f32 %v411, %v1213
  %v1227 = vmul.f32 %v413, %v1217
  %v1228 = vmul.f32 %v482, %v1221
  %v1229 = vmul.f32 %v484, %v1225
  %v1230 = vlaneseq
  %v1231 = vshrl.u32 %v1230, 7
  %v1232 = vsub.s32 0, %v1231
  %v1233 = vrot.slane %v1135, %v1232
  %v1234 = vlaneseq
  %v1235 = vshrl.u32 %v1234, 7
  %v1236 = vsub.s32 0, %v1235
  %v1237 = vrot.slane %v1137, %v1236
  %v1238 = vlaneseq
  %v1239 = vshrl.u32 %v1238, 7
  %v1240 = vsub.s32 0, %v1239
  %v1241 = vrot.slane %v1206, %v1240
  %v1242 = vlaneseq
  %v1243 = vshrl.u32 %v1242, 7
  %v1244 = vsub.s32 0, %v1243
  %v1245 = vrot.slane %v1208, %v1244
  %v1246 = vadd.f32 %v1226, %v1233
  %v1247 = vadd.f32 %v1227, %v1237
  %v1248 = vadd.f32 %v1228, %v1241
  %v1249 = vadd.f32 %v1229, %v1245
  %v1250 = vmax.f32 %v1246, 0.0
  %v1251 = vmax.f32 %v1247, 0.0
  %v1252 = vmax.f32 %v1248, 0.0
  %v1253 = vmax.f32 %v1249, 0.0
  %v1254 = vpack.c.bf16 %v1250, %v1250
  %v1255 = vpack.c.bf16 %v1251, %v1251
  %v1256 = vpack.c.bf16 %v1252, %v1252
  %v1257 = vpack.c.bf16 %v1253, %v1253
  %v1262 = vcombine.low %v1254, %v1255
  %v1263 = vcombine.low %v1256, %v1257
  %v1265 = vunpack.c.l.s4 1966171168
  %v1266 = vunpack.c.0.s8 %v1265
  %v1267 = vlaneseq
  %v1268 = vshrl.u32 %v1267, 7
  %v1269 = vsub.s32 %v1266, %v1268
  %v1270 = vrot.slane %v1262, %v1269
  %v1272 = vunpack.c.l.s4 1966171168
  %v1273 = vunpack.c.0.s8 %v1272
  %v1274 = vlaneseq
  %v1275 = vshrl.u32 %v1274, 7
  %v1276 = vsub.s32 %v1273, %v1275
  %v1277 = vrot.slane %v1263, %v1276
  %v1278 = vcombine.low %v1270, %v1277
  %v1280 = vunpack.c.l.s4 1966171168
  %v1281 = vunpack.c.0.s8 %v1280
  %v1282 = vlaneseq
  %v1283 = vshrl.u32 %v1282, 7
  %v1284 = vsub.s32 %v1281, %v1283
  %v1285 = vrot.slane %v1278, %v1284
  %1287 = vst [vmem:[%s13] sm:$0xf] %v1285
  // Predicated region
  $region54: #{extended_netG_forward.3} parent=0 // pred_check
    _
  $region55: #{extended_netG_forward.3} parent=0 // pred_check_branch
    %1289 = sbr.rel (0) target = $region57
  $region56: #{extended_netG_forward.3} parent=0 // pred_region
    _
  $region57: #{extended_netG_forward.3} parent=0 // pred_fallthru
    _
  // Predicated region
  $region58: #{extended_netG_forward.3} parent=0 // pred_check
    _
  $region59: #{extended_netG_forward.3} parent=0 // pred_check_branch
    %1291 = sbr.rel (0) target = $region61
  $region60: #{extended_netG_forward.3} parent=0 // pred_region
    _
  $region61: #{extended_netG_forward.3} parent=0 // pred_fallthru
    _

// kernel: extended_netG_forward.5
$region0: #{extended_netG_forward.5}
  #allocation0 [shape = 'u32[]', space=smem, size = 0x4, offset = 0x4, fixed_abs, tag = 'smem constant byte address 0x4 - core index']
  #allocation1 [shape = 'u32[144,128]{1,0:T(1,128)}', space=vmem, size = 0x12000, scoped, tag = 'internal scratch']
  %s0 = inlined_call_operand.vmem [shape: bf16[128,16], index: 0, kind: input, shape index: {}]
  %s1 = inlined_call_operand.vmem [shape: f32[1,16], index: 1, kind: input, shape index: {}]
  %s2 = inlined_call_operand.vmem [shape: f32[1,16], index: 2, kind: input, shape index: {}]
  %s3 = inlined_call_operand.vmem [shape: bf16[16,48], index: 3, kind: input, shape index: {}]
  %s4 = inlined_call_operand.vmem [shape: bf16[128,48], index: 4, kind: output, shape index: {}]
  %s5 = sld [smem:[#allocation0]]
  $region26: #{extended_netG_forward.5} parent=0
    _
  %s7 = ssub.s32 1, %s5
  %s8 = scalar_select 0, %s7, %s5
  // Predicated region
  $region2: #{extended_netG_forward.5} parent=0 // pred_check
    _
  $region3: #{extended_netG_forward.5} parent=0 // pred_check_branch
    %10 = sbr.rel (0) target = $region5
  $region4: #{extended_netG_forward.5} parent=0 // pred_region
    _
  $region5: #{extended_netG_forward.5} parent=0 // pred_fallthru
    _
  // Predicated region
  $region6: #{extended_netG_forward.5} parent=0 // pred_check
    _
  $region7: #{extended_netG_forward.5} parent=0 // pred_check_branch
    %12 = sbr.rel (0) target = $region9
  $region8: #{extended_netG_forward.5} parent=0 // pred_region
    _
  $region9: #{extended_netG_forward.5} parent=0 // pred_fallthru
    _
  // Predicated region
  $region10: #{extended_netG_forward.5} parent=0 // pred_check
    _
  $region11: #{extended_netG_forward.5} parent=0 // pred_check_branch
    %14 = sbr.rel (0) target = $region13
  $region12: #{extended_netG_forward.5} parent=0 // pred_region
    _
  $region13: #{extended_netG_forward.5} parent=0 // pred_fallthru
    _
  // Predicated region
  $region14: #{extended_netG_forward.5} parent=0 // pred_check
    _
  $region15: #{extended_netG_forward.5} parent=0 // pred_check_branch
    %16 = sbr.rel (0) target = $region17
  $region16: #{extended_netG_forward.5} parent=0 // pred_region
    _
  $region17: #{extended_netG_forward.5} parent=0 // pred_fallthru
    _
  %v18 = vld [vmem:[%s0] sm:$0xf]
  %v19 = vld [vmem:[%s0 + $0x4] sm:$0xf]
  %v20 = vld [vmem:[%s0 + $0x8] sm:$0xf]
  %v21 = vld [vmem:[%s0 + $0xc] sm:$0xf]
  %v22 = vld [vmem:[%s0 + $0x10] sm:$0xf]
  %v23 = vld [vmem:[%s0 + $0x14] sm:$0xf]
  %v24 = vld [vmem:[%s0 + $0x18] sm:$0xf]
  %v25 = vld [vmem:[%s0 + $0x1c] sm:$0xf]
  %v26 = vld [vmem:[%s0 + $0x20] sm:$0xf]
  %v27 = vld [vmem:[%s0 + $0x24] sm:$0xf]
  %v28 = vld [vmem:[%s0 + $0x28] sm:$0xf]
  %v29 = vld [vmem:[%s0 + $0x2c] sm:$0xf]
  %v30 = vld [vmem:[%s0 + $0x30] sm:$0xf]
  %v31 = vld [vmem:[%s0 + $0x34] sm:$0xf]
  %v32 = vld [vmem:[%s0 + $0x38] sm:$0xf]
  %v33 = vld [vmem:[%s0 + $0x3c] sm:$0xf]
  %v34 = vunpack.c.l.bf16 %v18
  %v35 = vunpack.c.l.bf16 %v19
  %v36 = vunpack.c.l.bf16 %v20
  %v37 = vunpack.c.l.bf16 %v21
  %v38 = vunpack.c.l.bf16 %v22
  %v39 = vunpack.c.l.bf16 %v23
  %v40 = vunpack.c.l.bf16 %v24
  %v41 = vunpack.c.l.bf16 %v25
  %v42 = vunpack.c.l.bf16 %v26
  %v43 = vunpack.c.l.bf16 %v27
  %v44 = vunpack.c.l.bf16 %v28
  %v45 = vunpack.c.l.bf16 %v29
  %v46 = vunpack.c.l.bf16 %v30
  %v47 = vunpack.c.l.bf16 %v31
  %v48 = vunpack.c.l.bf16 %v32
  %v49 = vunpack.c.l.bf16 %v33
  %v50 = vld [vmem:[%s1] sm:$0x1]
  %v52 = vlaneseq
  %v53 = vshrl.u32 %v52, 7
  %v54 = vsub.s32 0, %v53
  %v55 = vrot.slane %v50, %v54
  %v57 = vmul.f32 %v34, %v55
  %v58 = vmul.f32 %v35, %v55
  %v59 = vmul.f32 %v36, %v55
  %v60 = vmul.f32 %v37, %v55
  %v61 = vmul.f32 %v38, %v55
  %v62 = vmul.f32 %v39, %v55
  %v63 = vmul.f32 %v40, %v55
  %v64 = vmul.f32 %v41, %v55
  %v65 = vmul.f32 %v42, %v55
  %v66 = vmul.f32 %v43, %v55
  %v67 = vmul.f32 %v44, %v55
  %v68 = vmul.f32 %v45, %v55
  %v69 = vmul.f32 %v46, %v55
  %v70 = vmul.f32 %v47, %v55
  %v71 = vmul.f32 %v48, %v55
  %v72 = vmul.f32 %v49, %v55
  %v73 = vld [vmem:[%s2] sm:$0x1]
  %v75 = vlaneseq
  %v76 = vshrl.u32 %v75, 7
  %v77 = vsub.s32 0, %v76
  %v78 = vrot.slane %v73, %v77
  %v80 = vadd.f32 %v57, %v78
  %v81 = vadd.f32 %v58, %v78
  %v82 = vadd.f32 %v59, %v78
  %v83 = vadd.f32 %v60, %v78
  %v84 = vadd.f32 %v61, %v78
  %v85 = vadd.f32 %v62, %v78
  %v86 = vadd.f32 %v63, %v78
  %v87 = vadd.f32 %v64, %v78
  %v88 = vadd.f32 %v65, %v78
  %v89 = vadd.f32 %v66, %v78
  %v90 = vadd.f32 %v67, %v78
  %v91 = vadd.f32 %v68, %v78
  %v92 = vadd.f32 %v69, %v78
  %v93 = vadd.f32 %v70, %v78
  %v94 = vadd.f32 %v71, %v78
  %v95 = vadd.f32 %v72, %v78
  %v96 = vmax.f32 %v80, 0.0
  %v97 = vmax.f32 %v81, 0.0
  %v98 = vmax.f32 %v82, 0.0
  %v99 = vmax.f32 %v83, 0.0
  %v100 = vmax.f32 %v84, 0.0
  %v101 = vmax.f32 %v85, 0.0
  %v102 = vmax.f32 %v86, 0.0
  %v103 = vmax.f32 %v87, 0.0
  %v104 = vmax.f32 %v88, 0.0
  %v105 = vmax.f32 %v89, 0.0
  %v106 = vmax.f32 %v90, 0.0
  %v107 = vmax.f32 %v91, 0.0
  %v108 = vmax.f32 %v92, 0.0
  %v109 = vmax.f32 %v93, 0.0
  %v110 = vmax.f32 %v94, 0.0
  %v111 = vmax.f32 %v95, 0.0
  %v112 = vpack.c.bf16 %v97, %v96
  %v113 = vpack.c.bf16 %v99, %v98
  %v114 = vpack.c.bf16 %v101, %v100
  %v115 = vpack.c.bf16 %v103, %v102
  %v116 = vpack.c.bf16 %v105, %v104
  %v117 = vpack.c.bf16 %v107, %v106
  %v118 = vpack.c.bf16 %v109, %v108
  %v119 = vpack.c.bf16 %v111, %v110
  %v120 = vld [vmem:[%s3] sm:$0xf]
  %v121 = vld [vmem:[%s3 + $0x4] sm:$0xf]
  %v124 = vunpack.c.l.b16 %v120
  %v125 = vunpack.c.l.b16 %v121
  %v126 = vpack.c.b16 %v125, %v124
  %vm128 = vcmask 130048
  %v130 = vsel %vm128, %v112, 0
  %v133 = vsel %vm128, %v113, 0
  %v136 = vsel %vm128, %v114, 0
  %v139 = vsel %vm128, %v115, 0
  %v142 = vsel %vm128, %v116, 0
  %v145 = vsel %vm128, %v117, 0
  %v148 = vsel %vm128, %v118, 0
  %v151 = vsel %vm128, %v119, 0
  %153 = vmatprep.subr.bf16.mxu0 0
  %154 = vmatpush1.bf16.msra.mxu0 %v126
  %155 = vmatprep.subr.bf16.mxu0 0
  %156 = vmatpush1.bf16.msra.mxu0 0
  %157 = vmatprep.subr.bf16.mxu0 0
  %158 = vmatpush1.bf16.msra.mxu0 0
  %159 = vmatprep.subr.bf16.mxu0 0
  %160 = vmatpush1.bf16.msra.mxu0 0
  %161 = vmatprep.subr.bf16.mxu0 0
  %162 = vmatpush1.bf16.msra.mxu0 0
  %163 = vmatprep.subr.bf16.mxu0 0
  %164 = vmatpush1.bf16.msra.mxu0 0
  %165 = vmatprep.subr.bf16.mxu0 0
  %166 = vmatpush1.bf16.msra.mxu0 0
  %167 = vmatprep.subr.bf16.mxu0 0
  %168 = vmatpush1.bf16.msra.mxu0 0
  %169 = vmatprep.subr.bf16.mxu0 0
  %170 = vmatpush1.bf16.msra.mxu0 0
  %171 = vmatprep.subr.bf16.mxu0 0
  %172 = vmatpush1.bf16.msra.mxu0 0
  %173 = vmatprep.subr.bf16.mxu0 0
  %174 = vmatpush1.bf16.msra.mxu0 0
  %175 = vmatprep.subr.bf16.mxu0 0
  %176 = vmatpush1.bf16.msra.mxu0 0
  %177 = vmatprep.subr.bf16.mxu0 0
  %178 = vmatpush1.bf16.msra.mxu0 0
  %179 = vmatprep.subr.bf16.mxu0 0
  %180 = vmatpush1.bf16.msra.mxu0 0
  %181 = vmatprep.subr.bf16.mxu0 0
  %182 = vmatpush1.bf16.msra.mxu0 0
  %183 = vmatprep.subr.bf16.mxu0 0
  %184 = vmatpush1.bf16.msra.mxu0 0
  %185 = vmatprep.mubr.bf16.mxu0 0
  %186 = vmatmul.mubr.bf16.gmra.mrb[0].mxu0 %v130
  %v187 = vpop.f32.mrb[0].mxu0
  %v188 = vadd.f32 0.0, %v187
  %v189 = vpop.f32.mrb[0].mxu0
  %v190 = vpop.f32.mrb[0].mxu0
  %v191 = vadd.f32 0.0, %v190
  %v192 = vpop.f32.mrb[0].mxu0
  %193 = vmatprep.mubr.bf16.mxu0 0
  %194 = vmatmul.mubr.bf16.gmra.mrb[0].mxu0 %v133
  %v195 = vpop.f32.mrb[0].mxu0
  %v196 = vadd.f32 0.0, %v195
  %v197 = vpop.f32.mrb[0].mxu0
  %v198 = vpop.f32.mrb[0].mxu0
  %v199 = vadd.f32 0.0, %v198
  %v200 = vpop.f32.mrb[0].mxu0
  %201 = vmatprep.mubr.bf16.mxu0 0
  %202 = vmatmul.mubr.bf16.gmra.mrb[0].mxu0 %v136
  %v203 = vpop.f32.mrb[0].mxu0
  %v204 = vadd.f32 0.0, %v203
  %v205 = vpop.f32.mrb[0].mxu0
  %v206 = vpop.f32.mrb[0].mxu0
  %v207 = vadd.f32 0.0, %v206
  %v208 = vpop.f32.mrb[0].mxu0
  %209 = vmatprep.mubr.bf16.mxu0 0
  %210 = vmatmul.mubr.bf16.gmra.mrb[0].mxu0 %v139
  %v211 = vpop.f32.mrb[0].mxu0
  %v212 = vadd.f32 0.0, %v211
  %v213 = vpop.f32.mrb[0].mxu0
  %v214 = vpop.f32.mrb[0].mxu0
  %v215 = vadd.f32 0.0, %v214
  %v216 = vpop.f32.mrb[0].mxu0
  %217 = vmatprep.mubr.bf16.mxu0 0
  %218 = vmatmul.mubr.bf16.gmra.mrb[0].mxu0 %v142
  %v219 = vpop.f32.mrb[0].mxu0
  %v220 = vadd.f32 0.0, %v219
  %v221 = vpop.f32.mrb[0].mxu0
  %v222 = vpop.f32.mrb[0].mxu0
  %v223 = vadd.f32 0.0, %v222
  %v224 = vpop.f32.mrb[0].mxu0
  %225 = vmatprep.mubr.bf16.mxu0 0
  %226 = vmatmul.mubr.bf16.gmra.mrb[0].mxu0 %v145
  %v227 = vpop.f32.mrb[0].mxu0
  %v228 = vadd.f32 0.0, %v227
  %v229 = vpop.f32.mrb[0].mxu0
  %v230 = vpop.f32.mrb[0].mxu0
  %v231 = vadd.f32 0.0, %v230
  %v232 = vpop.f32.mrb[0].mxu0
  %233 = vmatprep.mubr.bf16.mxu0 0
  %234 = vmatmul.mubr.bf16.gmra.mrb[0].mxu0 %v148
  %v235 = vpop.f32.mrb[0].mxu0
  %v236 = vadd.f32 0.0, %v235
  %v237 = vpop.f32.mrb[0].mxu0
  %v238 = vpop.f32.mrb[0].mxu0
  %v239 = vadd.f32 0.0, %v238
  %v240 = vpop.f32.mrb[0].mxu0
  %241 = vmatprep.mubr.bf16.mxu0 0
  %242 = vmatmul.mubr.bf16.gmra.mrb[0].mxu0 %v151
  %v243 = vpop.f32.mrb[0].mxu0
  %v244 = vadd.f32 0.0, %v243
  %v245 = vpop.f32.mrb[0].mxu0
  %v246 = vpop.f32.mrb[0].mxu0
  %v247 = vadd.f32 0.0, %v246
  %v248 = vpop.f32.mrb[0].mxu0
  %249 = vdwg.mxu0
  %v250 = vpack.c.bf16 %v191, %v188
  %v251 = vpack.c.bf16 %v199, %v196
  %v252 = vpack.c.bf16 %v207, %v204
  %v253 = vpack.c.bf16 %v215, %v212
  %v254 = vpack.c.bf16 %v223, %v220
  %v255 = vpack.c.bf16 %v231, %v228
  %v256 = vpack.c.bf16 %v239, %v236
  %v257 = vpack.c.bf16 %v247, %v244
  %v266 = vunpack.c.l.b16 %v250
  %v267 = vunpack.c.h.b16 %v250
  %v268 = vunpack.c.l.b16 %v251
  %v269 = vunpack.c.h.b16 %v251
  %v270 = vunpack.c.l.b16 %v252
  %v271 = vunpack.c.h.b16 %v252
  %v272 = vunpack.c.l.b16 %v253
  %v273 = vunpack.c.h.b16 %v253
  %v274 = vunpack.c.l.b16 %v254
  %v275 = vunpack.c.h.b16 %v254
  %v276 = vunpack.c.l.b16 %v255
  %v277 = vunpack.c.h.b16 %v255
  %v278 = vunpack.c.l.b16 %v256
  %v279 = vunpack.c.h.b16 %v256
  %v280 = vunpack.c.l.b16 %v257
  %v281 = vunpack.c.h.b16 %v257
  %v282 = vpack.c.b16 %v266, %v266
  %v283 = vpack.c.b16 %v267, %v267
  %v284 = vpack.c.b16 %v268, %v268
  %v285 = vpack.c.b16 %v269, %v269
  %v286 = vpack.c.b16 %v270, %v270
  %v287 = vpack.c.b16 %v271, %v271
  %v288 = vpack.c.b16 %v272, %v272
  %v289 = vpack.c.b16 %v273, %v273
  %v290 = vpack.c.b16 %v274, %v274
  %v291 = vpack.c.b16 %v275, %v275
  %v292 = vpack.c.b16 %v276, %v276
  %v293 = vpack.c.b16 %v277, %v277
  %v294 = vpack.c.b16 %v278, %v278
  %v295 = vpack.c.b16 %v279, %v279
  %v296 = vpack.c.b16 %v280, %v280
  %v297 = vpack.c.b16 %v281, %v281
  %vm314 = vcmask 388096
  %315 = vst.msk [vmem:[%s4] sm:$0xf] %vm314, %v282
  %316 = vst.msk [vmem:[%s4 + $0x4] sm:$0xf] %vm314, %v283
  %317 = vst.msk [vmem:[%s4 + $0x8] sm:$0xf] %vm314, %v284
  %318 = vst.msk [vmem:[%s4 + $0xc] sm:$0xf] %vm314, %v285
  %319 = vst.msk [vmem:[%s4 + $0x10] sm:$0xf] %vm314, %v286
  %320 = vst.msk [vmem:[%s4 + $0x14] sm:$0xf] %vm314, %v287
  %321 = vst.msk [vmem:[%s4 + $0x18] sm:$0xf] %vm314, %v288
  %322 = vst.msk [vmem:[%s4 + $0x1c] sm:$0xf] %vm314, %v289
  %323 = vst.msk [vmem:[%s4 + $0x20] sm:$0xf] %vm314, %v290
  %324 = vst.msk [vmem:[%s4 + $0x24] sm:$0xf] %vm314, %v291
  %325 = vst.msk [vmem:[%s4 + $0x28] sm:$0xf] %vm314, %v292
  %326 = vst.msk [vmem:[%s4 + $0x2c] sm:$0xf] %vm314, %v293
  %327 = vst.msk [vmem:[%s4 + $0x30] sm:$0xf] %vm314, %v294
  %328 = vst.msk [vmem:[%s4 + $0x34] sm:$0xf] %vm314, %v295
  %329 = vst.msk [vmem:[%s4 + $0x38] sm:$0xf] %vm314, %v296
  %330 = vst.msk [vmem:[%s4 + $0x3c] sm:$0xf] %vm314, %v297
  // Predicated region
  $region18: #{extended_netG_forward.5} parent=0 // pred_check
    _
  $region19: #{extended_netG_forward.5} parent=0 // pred_check_branch
    %332 = sbr.rel (0) target = $region21
  $region20: #{extended_netG_forward.5} parent=0 // pred_region
    _
  $region21: #{extended_netG_forward.5} parent=0 // pred_fallthru
    _
  // Predicated region
  $region22: #{extended_netG_forward.5} parent=0 // pred_check
    _
  $region23: #{extended_netG_forward.5} parent=0 // pred_check_branch
    %334 = sbr.rel (0) target = $region25
  $region24: #{extended_netG_forward.5} parent=0 // pred_region
    _
  $region25: #{extended_netG_forward.5} parent=0 // pred_fallthru
    _

</llo_original>
